<compile_context>
chip_gen: v5e
topology: v5e:2x2
jax: 0.10.0
libtpu: 0.0.40
codegen_flags: <defaults>
</compile_context>

<pallas_src>
import functools

import jax
import jax.numpy as jnp
from jax.experimental import pallas as pl
from jax.experimental.pallas import tpu as pltpu


def _round_up(a, b):
    return (a + b - 1) // b * b


def _token_learner_kernel(x_cn_hbm, w_ref, b_ref, out_ref,
                          xwin_ref, y_ref, dma_sem, *,
                          offsets, margin, tile_n, win_w, inv_n, num_s, nt):
    b = pl.program_id(0)
    n = pl.program_id(1)
    slot = jax.lax.rem(n, 2)
    nxt = jax.lax.rem(n + 1, 2)

    def window_copy(col_start, sl):
        # Haloed window of the channel-major, zero-padded activation:
        # columns [col_start, col_start + TW) of x_cn[b]  ->  (C, TW) VMEM slot.
        return pltpu.make_async_copy(
            x_cn_hbm.at[b, :, pl.ds(col_start, win_w)],
            xwin_ref.at[sl], dma_sem.at[sl])

    # Prime the first window of this batch row (kept per-b so megacore B-splitting is safe).
    @pl.when(n == 0)
    def _prime():
        window_copy(0, 0).start()

    # Prefetch the next tile's window into the other slot while we compute this one.
    @pl.when(n + 1 < nt)
    def _prefetch():
        window_copy(pl.multiple_of((n + 1) * tile_n, 128), nxt).start()

    # The f32 output block is resident across the N (reduction) axis: zero it once.
    @pl.when(n == 0)
    def _init():
        out_ref[...] = jnp.zeros_like(out_ref)

    window_copy(0, slot).wait()

    xwin = xwin_ref[slot]                                    # (C, TW) bf16

    # ---- Stage 1: merged 3x3x3 conv -> one (27S, C) @ (C, TW) MXU matmul into VMEM ----
    y_ref[...] = jnp.dot(w_ref[...], xwin, preferred_element_type=jnp.float32)

    # Logits = sum of 27 statically lane-shifted (S, TN) row-slices of Y.
    logits = jnp.zeros((num_s, tile_n), jnp.float32)
    for k, off in enumerate(offsets):
        lo = margin + off                                    # static python int
        logits = logits + y_ref[k * num_s:(k + 1) * num_s, lo:lo + tile_n]

    # Sigmoid gate, with the 1/N of the spatial mean folded in; bf16 for the MXU.
    gate = (jax.nn.sigmoid(logits + b_ref[...]) * inv_n).astype(jnp.bfloat16)  # (S, TN)

    # ---- Stage 2: weighted feature sum from the already-resident window ----
    # Rows of x at 3-D zero-padding / tail positions are exactly zero, so the garbage
    # gate values computed there contribute nothing.
    x_center = xwin[:, margin:margin + tile_n]               # (C, TN) bf16
    out_ref[0] += jax.lax.dot_general(
        x_center, gate, (((1,), (1,)), ((), ())),            # contract the TN axis
        preferred_element_type=jnp.float32)                  # (C, S)


def token_learner_pallas(x, weight, bias, *, tile_n=2048,
                         vmem_limit_bytes=48 * 1024 * 1024):
    """x: (B, C, D, W, H); weight: (S, C, 3, 3, 3); bias: (S,). Returns (B, S, C) f32.

    tile_n / vmem_limit_bytes defaults are safe on v5e/v6e/v7x; on v5e/v6e (128 MiB VMEM)
    tile_n can be raised to ~4096 and vmem_limit_bytes to ~100 MiB for large C.
    """
    B, C, D, W, H = x.shape
    S = weight.shape[0]
    N = D * W * H
    Dp, Wp, Hp = D + 2, W + 2, H + 2
    Np = Dp * Wp * Hp
    M = Wp * Hp + Hp + 1                       # max |flat shift| of the 3x3x3 stencil
    MR = _round_up(M, 8)                       # halo margin (8-aligned, not 128)
    TN = max(128, _round_up(min(tile_n, _round_up(Np, 128)), 128))
    NT = -(-Np // TN)                          # cdiv
    TW = _round_up(TN + 2 * MR, 128)           # window width (lane-aligned DMA / scratch)
    L = (NT - 1) * TN + TW                     # padded column count of x_cn

    f32, bf16 = jnp.float32, jnp.bfloat16

    # Single prep pass over x: 3-D zero pad -> flatten -> place at column MR of (B, C, L).
    xpf = jnp.pad(x.astype(bf16), ((0, 0), (0, 0), (1, 1), (1, 1), (1, 1))).reshape(B, C, Np)
    x_cn = jnp.pad(xpf, ((0, 0), (0, 0), (MR, L - Np - MR)))

    # (S, C, 3, 3, 3) -> (27*S, C), row k*S+s with k = kd*9 + kw*3 + kh (matches `offsets`).
    YR = _round_up(27 * S, 8)
    w_all = weight.transpose(2, 3, 4, 0, 1).reshape(27 * S, C)
    w_all = jnp.pad(w_all, ((0, YR - 27 * S), (0, 0))).astype(bf16)
    b_t = bias.reshape(S, 1).astype(f32)

    offsets = tuple((kd - 1) * Wp * Hp + (kw - 1) * Hp + (kh - 1)
                    for kd in range(3) for kw in range(3) for kh in range(3))

    kernel = functools.partial(
        _token_learner_kernel, offsets=offsets, margin=MR, tile_n=TN,
        win_w=TW, inv_n=1.0 / float(N), num_s=S, nt=NT)

    out_cs = pl.pallas_call(
        kernel,
        out_shape=jax.ShapeDtypeStruct((B, C, S), f32),
        grid_spec=pltpu.PrefetchScalarGridSpec(
            num_scalar_prefetch=0,
            grid=(B, NT),
            in_specs=[
                pl.BlockSpec(memory_space=pl.ANY),                 # x_cn: raw HBM, manual DMA
                pl.BlockSpec((YR, C), lambda b, n: (0, 0)),        # merged conv weights
                pl.BlockSpec((S, 1), lambda b, n: (0, 0)),         # bias
            ],
            out_specs=pl.BlockSpec((1, C, S), lambda b, n: (b, 0, 0)),
            scratch_shapes=[
                pltpu.VMEM((2, C, TW), bf16),                      # double-buffered window
                pltpu.VMEM((YR, TW), f32),                         # merged conv output Y
                pltpu.SemaphoreType.DMA((2,)),
            ],
        ),
        compiler_params=pltpu.CompilerParams(
            dimension_semantics=("parallel", "arbitrary"),
            vmem_limit_bytes=vmem_limit_bytes,
        ),
    )(x_cn, w_all, b_t)
    return out_cs.transpose(0, 2, 1)                               # (B, S, C)


def token_learner_reference(x, weight, bias):
    """Pure-JAX f32 reference matching the PyTorch forward exactly."""
    B, C, D, W, H = x.shape
    S = weight.shape[0]
    N = D * W * H
    conv = jax.lax.conv_general_dilated(
        x, weight, window_strides=(1, 1, 1),
        padding=[(1, 1), (1, 1), (1, 1)],
        dimension_numbers=("NCDHW", "OIDHW", "NCDHW"),
    ) + bias.reshape(1, S, 1, 1, 1)
    selected = jax.nn.sigmoid(conv.reshape(B, S, N, 1))            # (B, S, N, 1)
    xr = x.reshape(B, C, N).transpose(0, 2, 1)[:, None]            # (B, 1, N, C)
    return (xr * selected).mean(axis=2)                            # (B, S, C)


if __name__ == "__main__":
    # Small shapes consistent with the module: Conv3d over (B, C, D, W, H).
    B, C, S = 2, 4, 8
    D, W, H = 4, 8, 8

    key = jax.random.PRNGKey(0)
    kx, kw, kb = jax.random.split(key, 3)
    x = jax.random.normal(kx, (B, C, D, W, H), dtype=jnp.float32)
    weight = jax.random.normal(kw, (S, C, 3, 3, 3), dtype=jnp.float32) * 0.1
    bias = jax.random.normal(kb, (S,), dtype=jnp.float32) * 0.1

    # tile_n=256 -> NT=3 tiles: exercises the resident-output accumulation, the odd-tile
    # double-buffer parity, and the halo windows.
    out = jax.block_until_ready(token_learner_pallas(x, weight, bias, tile_n=256))
    ref = jax.block_until_ready(token_learner_reference(x, weight, bias))

    assert out.shape == (B, S, C), out.shape
    err = float(jnp.max(jnp.abs(out - ref)))
    assert err < 5e-3, err   # bf16 matmul operands, f32 accumulation

    print("KERNEL_OK")
</pallas_src>

<mosaic_0001>
module attributes {stable_mosaic.version = 11 : i64} {
  func.func @_token_learner_kernel(%arg0: i32, %arg1: i32, %arg2: memref<2x4x1024xbf16, #tpu.memory_space<any>>, %arg3: memref<216x4xbf16, #tpu.memory_space<vmem>>, %arg4: memref<8x1xf32, #tpu.memory_space<vmem>>, %arg5: memref<1x4x8xf32, #tpu.memory_space<vmem>>, %arg6: memref<2x4x512xbf16, #tpu.memory_space<vmem>>, %arg7: memref<216x512xf32, #tpu.memory_space<vmem>>, %arg8: memref<2x!tpu.dma_semaphore, #tpu.memory_space<semaphore_mem>>) attributes {dimension_semantics = [#tpu.dimension_semantics<parallel>, #tpu.dimension_semantics<arbitrary>], iteration_bounds = array<i64: 2, 3>, scalar_prefetch = 0 : i64, scratch_operands = 3 : i64, tpu.core_type = #tpu.core_type<tc>, window_params = [{}, {pipeline_mode = #tpu.pipeline_mode<synchronous>, transform_indices = @transform_1, window_bounds = array<i64: 216, 4>}, {pipeline_mode = #tpu.pipeline_mode<synchronous>, transform_indices = @transform_2, window_bounds = array<i64: 8, 1>}, {transform_indices = @transform_3, window_bounds = array<i64: 1, 4, 8>}]} {
    %c2_i32 = arith.constant 2 : i32
    %0 = arith.remsi %arg1, %c2_i32 : i32
    %c1_i32 = arith.constant 1 : i32
    %1 = arith.addi %arg1, %c1_i32 : i32
    %c2_i32_0 = arith.constant 2 : i32
    %2 = arith.remsi %1, %c2_i32_0 : i32
    %c0_i32 = arith.constant 0 : i32
    %3 = arith.cmpi eq, %arg1, %c0_i32 : i32
    %4 = arith.extui %3 : i1 to i32
    %c0_i32_1 = arith.constant 0 : i32
    %5 = arith.cmpi ne, %4, %c0_i32_1 : i32
    scf.if %5 {
      %c0_i32_29 = arith.constant 0 : i32
      %c0_i32_30 = arith.constant 0 : i32
      %c0_i32_31 = arith.constant 0 : i32
      %c0_i32_32 = arith.constant 0 : i32
      %99 = tpu.memref_slice %arg2[%arg0, %c0_i32_31, %c0_i32_32] : memref<2x4x1024xbf16, #tpu.memory_space<any>> -> memref<1x4x512xbf16, #tpu.memory_space<any>>
      %100 = tpu.memref_squeeze %99 : memref<1x4x512xbf16, #tpu.memory_space<any>> -> memref<4x512xbf16, #tpu.memory_space<any>>
      %c0_i32_33 = arith.constant 0 : i32
      %c0_i32_34 = arith.constant 0 : i32
      %101 = tpu.memref_slice %arg6[%c0_i32_29, %c0_i32_33, %c0_i32_34] : memref<2x4x512xbf16, #tpu.memory_space<vmem>> -> memref<1x4x512xbf16, #tpu.memory_space<vmem>>
      %102 = tpu.memref_squeeze %101 : memref<1x4x512xbf16, #tpu.memory_space<vmem>> -> memref<4x512xbf16, #tpu.memory_space<vmem>>
      %103 = tpu.memref_slice %arg8[%c0_i32_30] : memref<2x!tpu.dma_semaphore, #tpu.memory_space<semaphore_mem>> -> memref<1x!tpu.dma_semaphore, #tpu.memory_space<semaphore_mem>>
      %104 = tpu.memref_squeeze %103 : memref<1x!tpu.dma_semaphore, #tpu.memory_space<semaphore_mem>> -> memref<!tpu.dma_semaphore, #tpu.memory_space<semaphore_mem>>
      tpu.enqueue_dma source(%100 : memref<4x512xbf16, #tpu.memory_space<any>>) target(%102 : memref<4x512xbf16, #tpu.memory_space<vmem>>) target_semaphore(%104 : memref<!tpu.dma_semaphore, #tpu.memory_space<semaphore_mem>>)
    } else {
    }
    %c1_i32_2 = arith.constant 1 : i32
    %6 = arith.addi %arg1, %c1_i32_2 : i32
    %c3_i32 = arith.constant 3 : i32
    %7 = arith.cmpi slt, %6, %c3_i32 : i32
    %8 = arith.extui %7 : i1 to i32
    %c0_i32_3 = arith.constant 0 : i32
    %9 = arith.cmpi ne, %8, %c0_i32_3 : i32
    scf.if %9 {
      %c1_i32_29 = arith.constant 1 : i32
      %99 = arith.addi %arg1, %c1_i32_29 : i32
      %c256_i32 = arith.constant 256 : i32
      %100 = arith.muli %99, %c256_i32 : i32
      %101 = tpu.assume_multiple %100, 128 : i32
      %c0_i32_30 = arith.constant 0 : i32
      %102 = tpu.memref_slice %arg2[%arg0, %c0_i32_30, %101] : memref<2x4x1024xbf16, #tpu.memory_space<any>> -> memref<1x4x512xbf16, #tpu.memory_space<any>>
      %103 = tpu.memref_squeeze %102 : memref<1x4x512xbf16, #tpu.memory_space<any>> -> memref<4x512xbf16, #tpu.memory_space<any>>
      %c0_i32_31 = arith.constant 0 : i32
      %c0_i32_32 = arith.constant 0 : i32
      %104 = tpu.memref_slice %arg6[%2, %c0_i32_31, %c0_i32_32] : memref<2x4x512xbf16, #tpu.memory_space<vmem>> -> memref<1x4x512xbf16, #tpu.memory_space<vmem>>
      %105 = tpu.memref_squeeze %104 : memref<1x4x512xbf16, #tpu.memory_space<vmem>> -> memref<4x512xbf16, #tpu.memory_space<vmem>>
      %106 = tpu.memref_slice %arg8[%2] : memref<2x!tpu.dma_semaphore, #tpu.memory_space<semaphore_mem>> -> memref<1x!tpu.dma_semaphore, #tpu.memory_space<semaphore_mem>>
      %107 = tpu.memref_squeeze %106 : memref<1x!tpu.dma_semaphore, #tpu.memory_space<semaphore_mem>> -> memref<!tpu.dma_semaphore, #tpu.memory_space<semaphore_mem>>
      tpu.enqueue_dma source(%103 : memref<4x512xbf16, #tpu.memory_space<any>>) target(%105 : memref<4x512xbf16, #tpu.memory_space<vmem>>) target_semaphore(%107 : memref<!tpu.dma_semaphore, #tpu.memory_space<semaphore_mem>>)
    } else {
    }
    %c0_i32_4 = arith.constant 0 : i32
    %10 = arith.cmpi eq, %arg1, %c0_i32_4 : i32
    %11 = arith.extui %10 : i1 to i32
    %c0_i32_5 = arith.constant 0 : i32
    %12 = arith.cmpi ne, %11, %c0_i32_5 : i32
    scf.if %12 {
      %cst_29 = arith.constant 0.000000e+00 : f32
      %99 = vector.broadcast %cst_29 : f32 to vector<1x4x8xf32>
      %c0_30 = arith.constant 0 : index
      %c0_31 = arith.constant 0 : index
      %c0_32 = arith.constant 0 : index
      %100 = vector.load %arg5[%c0_30, %c0_31, %c0_32] : memref<1x4x8xf32, #tpu.memory_space<vmem>>, vector<1x4x8xf32>
      tpu.vector_store %arg5[%c0_30, %c0_31, %c0_32], %99 {strides = array<i32>} : memref<1x4x8xf32, #tpu.memory_space<vmem>>, vector<1x4x8xf32>,
    } else {
    }
    %c0_i32_6 = arith.constant 0 : i32
    %c0_i32_7 = arith.constant 0 : i32
    %13 = tpu.memref_slice %arg2[%arg0, %c0_i32_6, %c0_i32_7] : memref<2x4x1024xbf16, #tpu.memory_space<any>> -> memref<1x4x512xbf16, #tpu.memory_space<any>>
    %14 = tpu.memref_squeeze %13 : memref<1x4x512xbf16, #tpu.memory_space<any>> -> memref<4x512xbf16, #tpu.memory_space<any>>
    %c0_i32_8 = arith.constant 0 : i32
    %c0_i32_9 = arith.constant 0 : i32
    %15 = tpu.memref_slice %arg6[%0, %c0_i32_8, %c0_i32_9] : memref<2x4x512xbf16, #tpu.memory_space<vmem>> -> memref<1x4x512xbf16, #tpu.memory_space<vmem>>
    %16 = tpu.memref_squeeze %15 : memref<1x4x512xbf16, #tpu.memory_space<vmem>> -> memref<4x512xbf16, #tpu.memory_space<vmem>>
    %17 = tpu.memref_slice %arg8[%0] : memref<2x!tpu.dma_semaphore, #tpu.memory_space<semaphore_mem>> -> memref<1x!tpu.dma_semaphore, #tpu.memory_space<semaphore_mem>>
    %18 = tpu.memref_squeeze %17 : memref<1x!tpu.dma_semaphore, #tpu.memory_space<semaphore_mem>> -> memref<!tpu.dma_semaphore, #tpu.memory_space<semaphore_mem>>
    tpu.wait_dma2 semaphore(%18 : memref<!tpu.dma_semaphore, #tpu.memory_space<semaphore_mem>>) src(%14 : memref<4x512xbf16, #tpu.memory_space<any>>) dst(%16 : memref<4x512xbf16, #tpu.memory_space<vmem>>)
    %19 = arith.index_cast %0 : i32 to index
    %c0 = arith.constant 0 : index
    %c0_10 = arith.constant 0 : index
    %20 = vector.load %arg6[%19, %c0, %c0_10] : memref<2x4x512xbf16, #tpu.memory_space<vmem>>, vector<1x4x512xbf16>
    %21 = vector.shape_cast %20 : vector<1x4x512xbf16> to vector<4x512xbf16>
    %c0_11 = arith.constant 0 : index
    %c0_12 = arith.constant 0 : index
    %22 = vector.load %arg3[%c0_11, %c0_12] : memref<216x4xbf16, #tpu.memory_space<vmem>>, vector<216x4xbf16>
    %cst = arith.constant dense<0.000000e+00> : vector<216x512xf32>
    %23 = tpu.matmul %22, %21, %cst {dimension_numbers = #tpu.dot_dimension_numbers<[1], [0], [0], [1], [0, 0, 1, 1], [], []>} : vector<216x4xbf16>, vector<4x512xbf16>, vector<216x512xf32> -> vector<216x512xf32>
    %c0_13 = arith.constant 0 : index
    %c0_14 = arith.constant 0 : index
    %24 = vector.load %arg7[%c0_13, %c0_14] : memref<216x512xf32, #tpu.memory_space<vmem>>, vector<216x512xf32>
    tpu.vector_store %arg7[%c0_13, %c0_14], %23 {strides = array<i32>} : memref<216x512xf32, #tpu.memory_space<vmem>>, vector<216x512xf32>,
    %cst_15 = arith.constant 0.000000e+00 : f32
    %25 = vector.broadcast %cst_15 : f32 to vector<8x256xf32>
    %c0_16 = arith.constant 0 : index
    %c1 = arith.constant 1 : index
    %26 = vector.load %arg7[%c0_16, %c1] : memref<216x512xf32, #tpu.memory_space<vmem>>, vector<8x256xf32>
    %27 = arith.addf %25, %26 : vector<8x256xf32>
    %c8 = arith.constant 8 : index
    %c2 = arith.constant 2 : index
    %28 = vector.load %arg7[%c8, %c2] : memref<216x512xf32, #tpu.memory_space<vmem>>, vector<8x256xf32>
    %29 = arith.addf %27, %28 : vector<8x256xf32>
    %c16 = arith.constant 16 : index
    %c3 = arith.constant 3 : index
    %30 = vector.load %arg7[%c16, %c3] : memref<216x512xf32, #tpu.memory_space<vmem>>, vector<8x256xf32>
    %31 = arith.addf %29, %30 : vector<8x256xf32>
    %c24 = arith.constant 24 : index
    %c11 = arith.constant 11 : index
    %32 = vector.load %arg7[%c24, %c11] : memref<216x512xf32, #tpu.memory_space<vmem>>, vector<8x256xf32>
    %33 = arith.addf %31, %32 : vector<8x256xf32>
    %c32 = arith.constant 32 : index
    %c12 = arith.constant 12 : index
    %34 = vector.load %arg7[%c32, %c12] : memref<216x512xf32, #tpu.memory_space<vmem>>, vector<8x256xf32>
    %35 = arith.addf %33, %34 : vector<8x256xf32>
    %c40 = arith.constant 40 : index
    %c13 = arith.constant 13 : index
    %36 = vector.load %arg7[%c40, %c13] : memref<216x512xf32, #tpu.memory_space<vmem>>, vector<8x256xf32>
    %37 = arith.addf %35, %36 : vector<8x256xf32>
    %c48 = arith.constant 48 : index
    %c21 = arith.constant 21 : index
    %38 = vector.load %arg7[%c48, %c21] : memref<216x512xf32, #tpu.memory_space<vmem>>, vector<8x256xf32>
    %39 = arith.addf %37, %38 : vector<8x256xf32>
    %c56 = arith.constant 56 : index
    %c22 = arith.constant 22 : index
    %40 = vector.load %arg7[%c56, %c22] : memref<216x512xf32, #tpu.memory_space<vmem>>, vector<8x256xf32>
    %41 = arith.addf %39, %40 : vector<8x256xf32>
    %c64 = arith.constant 64 : index
    %c23 = arith.constant 23 : index
    %42 = vector.load %arg7[%c64, %c23] : memref<216x512xf32, #tpu.memory_space<vmem>>, vector<8x256xf32>
    %43 = arith.addf %41, %42 : vector<8x256xf32>
    %c72 = arith.constant 72 : index
    %c101 = arith.constant 101 : index
    %44 = vector.load %arg7[%c72, %c101] : memref<216x512xf32, #tpu.memory_space<vmem>>, vector<8x256xf32>
    %45 = arith.addf %43, %44 : vector<8x256xf32>
    %c80 = arith.constant 80 : index
    %c102 = arith.constant 102 : index
    %46 = vector.load %arg7[%c80, %c102] : memref<216x512xf32, #tpu.memory_space<vmem>>, vector<8x256xf32>
    %47 = arith.addf %45, %46 : vector<8x256xf32>
    %c88 = arith.constant 88 : index
    %c103 = arith.constant 103 : index
    %48 = vector.load %arg7[%c88, %c103] : memref<216x512xf32, #tpu.memory_space<vmem>>, vector<8x256xf32>
    %49 = arith.addf %47, %48 : vector<8x256xf32>
    %c96 = arith.constant 96 : index
    %c111 = arith.constant 111 : index
    %50 = vector.load %arg7[%c96, %c111] : memref<216x512xf32, #tpu.memory_space<vmem>>, vector<8x256xf32>
    %51 = arith.addf %49, %50 : vector<8x256xf32>
    %c104 = arith.constant 104 : index
    %c112 = arith.constant 112 : index
    %52 = vector.load %arg7[%c104, %c112] : memref<216x512xf32, #tpu.memory_space<vmem>>, vector<8x256xf32>
    %53 = arith.addf %51, %52 : vector<8x256xf32>
    %c112_17 = arith.constant 112 : index
    %c113 = arith.constant 113 : index
    %54 = vector.load %arg7[%c112_17, %c113] : memref<216x512xf32, #tpu.memory_space<vmem>>, vector<8x256xf32>
    %55 = arith.addf %53, %54 : vector<8x256xf32>
    %c120 = arith.constant 120 : index
    %c121 = arith.constant 121 : index
    %56 = vector.load %arg7[%c120, %c121] : memref<216x512xf32, #tpu.memory_space<vmem>>, vector<8x256xf32>
    %57 = arith.addf %55, %56 : vector<8x256xf32>
    %c128 = arith.constant 128 : index
    %c122 = arith.constant 122 : index
    %58 = vector.load %arg7[%c128, %c122] : memref<216x512xf32, #tpu.memory_space<vmem>>, vector<8x256xf32>
    %59 = arith.addf %57, %58 : vector<8x256xf32>
    %c136 = arith.constant 136 : index
    %c123 = arith.constant 123 : index
    %60 = vector.load %arg7[%c136, %c123] : memref<216x512xf32, #tpu.memory_space<vmem>>, vector<8x256xf32>
    %61 = arith.addf %59, %60 : vector<8x256xf32>
    %c144 = arith.constant 144 : index
    %c201 = arith.constant 201 : index
    %62 = vector.load %arg7[%c144, %c201] : memref<216x512xf32, #tpu.memory_space<vmem>>, vector<8x256xf32>
    %63 = arith.addf %61, %62 : vector<8x256xf32>
    %c152 = arith.constant 152 : index
    %c202 = arith.constant 202 : index
    %64 = vector.load %arg7[%c152, %c202] : memref<216x512xf32, #tpu.memory_space<vmem>>, vector<8x256xf32>
    %65 = arith.addf %63, %64 : vector<8x256xf32>
    %c160 = arith.constant 160 : index
    %c203 = arith.constant 203 : index
    %66 = vector.load %arg7[%c160, %c203] : memref<216x512xf32, #tpu.memory_space<vmem>>, vector<8x256xf32>
    %67 = arith.addf %65, %66 : vector<8x256xf32>
    %c168 = arith.constant 168 : index
    %c211 = arith.constant 211 : index
    %68 = vector.load %arg7[%c168, %c211] : memref<216x512xf32, #tpu.memory_space<vmem>>, vector<8x256xf32>
    %69 = arith.addf %67, %68 : vector<8x256xf32>
    %c176 = arith.constant 176 : index
    %c212 = arith.constant 212 : index
    %70 = vector.load %arg7[%c176, %c212] : memref<216x512xf32, #tpu.memory_space<vmem>>, vector<8x256xf32>
    %71 = arith.addf %69, %70 : vector<8x256xf32>
    %c184 = arith.constant 184 : index
    %c213 = arith.constant 213 : index
    %72 = vector.load %arg7[%c184, %c213] : memref<216x512xf32, #tpu.memory_space<vmem>>, vector<8x256xf32>
    %73 = arith.addf %71, %72 : vector<8x256xf32>
    %c192 = arith.constant 192 : index
    %c221 = arith.constant 221 : index
    %74 = vector.load %arg7[%c192, %c221] : memref<216x512xf32, #tpu.memory_space<vmem>>, vector<8x256xf32>
    %75 = arith.addf %73, %74 : vector<8x256xf32>
    %c200 = arith.constant 200 : index
    %c222 = arith.constant 222 : index
    %76 = vector.load %arg7[%c200, %c222] : memref<216x512xf32, #tpu.memory_space<vmem>>, vector<8x256xf32>
    %77 = arith.addf %75, %76 : vector<8x256xf32>
    %c208 = arith.constant 208 : index
    %c223 = arith.constant 223 : index
    %78 = vector.load %arg7[%c208, %c223] : memref<216x512xf32, #tpu.memory_space<vmem>>, vector<8x256xf32>
    %79 = arith.addf %77, %78 : vector<8x256xf32>
    %c0_18 = arith.constant 0 : index
    %c0_19 = arith.constant 0 : index
    %80 = vector.load %arg4[%c0_18, %c0_19] : memref<8x1xf32, #tpu.memory_space<vmem>>, vector<8x1xf32>
    %81 = vector.broadcast %80 : vector<8x1xf32> to vector<8x256xf32>
    %82 = arith.addf %79, %81 : vector<8x256xf32>
    %83 = arith.negf %82 : vector<8x256xf32>
    %84 = math.exp %83 : vector<8x256xf32>
    %cst_20 = arith.constant 1.000000e+00 : f32
    %85 = vector.broadcast %cst_20 : f32 to vector<8x256xf32>
    %86 = arith.addf %85, %84 : vector<8x256xf32>
    %87 = arith.divf %85, %86 : vector<8x256xf32>
    %cst_21 = arith.constant 3.906250e-03 : f32
    %88 = vector.broadcast %cst_21 : f32 to vector<8x256xf32>
    %89 = arith.mulf %87, %88 : vector<8x256xf32>
    %90 = arith.truncf %89 : vector<8x256xf32> to vector<8x256xbf16>
    %91 = vector.extract_strided_slice %21 {offsets = [0, 112], sizes = [4, 256], strides = [1, 1]} : vector<4x512xbf16> to vector<4x256xbf16>
    %c0_22 = arith.constant 0 : index
    %c0_23 = arith.constant 0 : index
    %c0_24 = arith.constant 0 : index
    %92 = vector.load %arg5[%c0_22, %c0_23, %c0_24] : memref<1x4x8xf32, #tpu.memory_space<vmem>>, vector<1x4x8xf32>
    %93 = vector.shape_cast %92 : vector<1x4x8xf32> to vector<4x8xf32>
    %cst_25 = arith.constant dense<0.000000e+00> : vector<4x8xf32>
    %94 = tpu.matmul %91, %90, %cst_25 {dimension_numbers = #tpu.dot_dimension_numbers<[1], [1], [0], [0], [0, 0, 1, 0], [], []>} : vector<4x256xbf16>, vector<8x256xbf16>, vector<4x8xf32> -> vector<4x8xf32>
    %95 = arith.addf %93, %94 : vector<4x8xf32>
    %c0_26 = arith.constant 0 : index
    %c0_27 = arith.constant 0 : index
    %c0_28 = arith.constant 0 : index
    %96 = vector.load %arg5[%c0_26, %c0_27, %c0_28] : memref<1x4x8xf32, #tpu.memory_space<vmem>>, vector<1x4x8xf32>
    %97 = vector.shape_cast %96 : vector<1x4x8xf32> to vector<4x8xf32>
    %98 = vector.shape_cast %95 : vector<4x8xf32> to vector<1x4x8xf32>
    tpu.vector_store %arg5[%c0_26, %c0_27, %c0_28], %98 {strides = array<i32>} : memref<1x4x8xf32, #tpu.memory_space<vmem>>, vector<1x4x8xf32>,
    return
  }
  func.func @transform_1(%arg0: i32, %arg1: i32) -> (i32, i32) {
    %c0_i32 = arith.constant 0 : i32
    %c0_i32_0 = arith.constant 0 : i32
    %c0_i32_1 = arith.constant 0 : i32
    return %c0_i32, %c0_i32_0 : i32, i32
  }
  func.func @transform_2(%arg0: i32, %arg1: i32) -> (i32, i32) {
    %c0_i32 = arith.constant 0 : i32
    %c0_i32_0 = arith.constant 0 : i32
    %c0_i32_1 = arith.constant 0 : i32
    return %c0_i32, %c0_i32_0 : i32, i32
  }
  func.func @transform_3(%arg0: i32, %arg1: i32) -> (i32, i32, i32) {
    %c0_i32 = arith.constant 0 : i32
    %c0_i32_0 = arith.constant 0 : i32
    %c0_i32_1 = arith.constant 0 : i32
    return %arg0, %c0_i32, %c0_i32_0 : i32, i32, i32
  }
}

</mosaic_0001>

<llo_original>
// kernel: tpu_custom_call.1
$region0: #{tpu_custom_call.1}
  #allocation0 [shape = 'u32[]', space=smem, size = 0x4, offset = 0x4, fixed_abs, tag = 'smem constant byte address 0x4 - core index']
  #allocation1 [shape = 'u32[72,128]{1,0:T(1,128)}', space=vmem, size = 0x9000, scoped, tag = 'internal scratch']
  #allocation2 [shape = 'bf16[2,4,512]{2,1,0:T(4,128)(2,1)}', space=vmem, size = 0x2000, scoped, tag = 'scratch operand']
  #allocation3 [shape = 'f32[216,512]{1,0:T(8,128)}', space=vmem, size = 0x6c000, scoped, tag = 'scratch operand']
  #allocation4 [shape = 's32[2]{0}', space=sflag, size = 0x8, scoped, tag = 'scratch operand']
  #allocation7 [shape = 's32[]', space=sflag, size = 0x4, offset = 0, fixed_abs, tag = 'sflag constant byte address 0x0 - dummy sync flag']
  #allocation8 [shape = 's32[]', space=sflag, size = 0x4, offset = 0, fixed_abs, tag = 'sflag constant byte address 0x0 - dummy sync flag']
  %s0 = inlined_call_operand.vmem [shape: bf16[2,4,1024], index: 0, kind: input, shape index: {}]
  %s1 = inlined_call_operand.vmem [shape: bf16[216,4], index: 1, kind: input, shape index: {}]
  %s2 = inlined_call_operand.vmem [shape: f32[8,1], index: 2, kind: input, shape index: {}]
  %s3 = inlined_call_operand.hbm [shape: f32[2,4,8], index: 3, kind: output, shape index: {}]
  %s4 = sld [smem:[#allocation0]]
  $region121: #{tpu_custom_call.1} parent=0
    _
  %s6 = ssub.s32 1, %s4
  %s7 = scalar_select 0, %s6, %s4
  $region1: #{tpu_custom_call.1} parent=0
    #allocation5 [shape = 'u8[4096]{0}', space=vmem, size = 0x1000, scoped, tag = 'output window, operand 0']
    #allocation6 [shape = 's32[2]{0}', space=sflag, size = 0x8, scoped, tag = 'scoped memory for tpu_custom_call.1']
    %8 = vsyncpa [#allocation6], 0
    %s9 = scalar_lea.sflag [#allocation6], 1
    %10 = vsyncpa %s9, 0
    loop: start=0, step=1, limit=8
    $region2: #{tpu_custom_call.1} parent=1 // loop_pre_header
      _
    $region3: #{tpu_custom_call.1} parent=1 // loop_header
      %s12 = sphi 0, %s16
      %p13 = scmp.ge.s32.totalorder %s12, 8
      %s19 = sphi 0, %s31
      %s20 = sphi 0, %s27
      %s21 = sphi 0, %s19
      %s22 = sphi 0, %s20
      %s23 = sphi 0, %s21
      %s24 = sphi 0, %s22
      %s32 = sphi 0, %s32
      %s34 = sphi 0, %s32
      %s35 = sphi 0, %s34
      %s49 = sphi 0, %s35
      %s53 = sphi 0, %s53
      %s55 = sphi 0, %s53
      %s56 = sphi 0, %s55
      %s70 = sphi 0, %s56
      %s76 = sphi 0, %s78
      %s79 = sphi 0, %s76
      %s80 = sphi 0, %s79
      %s96 = sphi 0, %s80
    $region4: #{tpu_custom_call.1} parent=1 // loop_header_branch
      %15 = sbr.rel (%p13) target = $region8
    $region5: #{tpu_custom_call.1} parent=1 // loop_body
      %s17 = ssub.s32 %s12, 1
      %s18 = ssub.s32 %s12, 2
      %s25 = sadd.s32 1, %s20
      %p26 = scmp.ge.s32.totalorder %s25, 3
      %s27 = scalar_select %p26, 0, %s25
      %s28 = sadd.s32 1, %s19
      %s29 = scalar_select %p26, %s28, %s19
      %p30 = scmp.ge.s32.totalorder %s29, 2
      %s31 = scalar_select %p30, 0, %s29
      %s33 = sadd.s32 %s32, 1
      %p36 = scmp.eq.s32.totalorder %s12, 5
      %p37 = scmp.ne.s32.totalorder %s32, %s34
      %p38 = scmp.eq.s32.totalorder %s12, 0
      %p39 = por %p37, %p38
      %p40 = scmp.ne.s32.totalorder %s32, %s34
      %p41 = scmp.eq.s32.totalorder %s17, 5
      %p42 = por %p40, %p41
      %p43 = scmp.ne.s32.totalorder %s34, %s35
      %p44 = scmp.eq.s32.totalorder %s17, 0
      %p45 = por %p43, %p44
      %p46 = scmp.ne.s32.totalorder %s34, %s35
      %p47 = scmp.eq.s32.totalorder %s18, 5
      %p48 = por %p46, %p47
      %p50 = scmp.ne.s32.totalorder %s35, %s49
      %p51 = scmp.eq.s32.totalorder %s18, 0
      %p52 = por %p50, %p51
      %s54 = sadd.s32 %s53, 1
      %p57 = scmp.eq.s32.totalorder %s12, 5
      %p58 = scmp.ne.s32.totalorder %s53, %s55
      %p59 = scmp.eq.s32.totalorder %s12, 0
      %p60 = por %p58, %p59
      %p61 = scmp.ne.s32.totalorder %s53, %s55
      %p62 = scmp.eq.s32.totalorder %s17, 5
      %p63 = por %p61, %p62
      %p64 = scmp.ne.s32.totalorder %s55, %s56
      %p65 = scmp.eq.s32.totalorder %s17, 0
      %p66 = por %p64, %p65
      %p67 = scmp.ne.s32.totalorder %s55, %s56
      %p68 = scmp.eq.s32.totalorder %s18, 5
      %p69 = por %p67, %p68
      %p71 = scmp.ne.s32.totalorder %s56, %s70
      %p72 = scmp.eq.s32.totalorder %s18, 0
      %p73 = por %p71, %p72
      %s74 = ssub.s32 %s19, %s31
      %p75 = scmp.eq.s32.totalorder %s74, 0
      %s77 = sadd.s32 %s76, 1
      %s78 = scalar_select %p75, %s76, %s77
      %p81 = pneg %p75
      %p82 = scmp.eq.s32.totalorder %s12, 5
      %p83 = por %p81, %p82
      %p84 = scmp.ne.s32.totalorder %s76, %s79
      %p85 = scmp.eq.s32.totalorder %s12, 0
      %p86 = por %p84, %p85
      %p87 = scmp.ne.s32.totalorder %s76, %s79
      %p88 = scmp.eq.s32.totalorder %s17, 5
      %p89 = por %p87, %p88
      %p90 = scmp.ne.s32.totalorder %s79, %s80
      %p91 = scmp.eq.s32.totalorder %s17, 0
      %p92 = por %p90, %p91
      %p93 = scmp.ne.s32.totalorder %s79, %s80
      %p94 = scmp.eq.s32.totalorder %s18, 5
      %p95 = por %p93, %p94
      %p97 = scmp.ne.s32.totalorder %s80, %s96
      %p98 = scmp.eq.s32.totalorder %s18, 0
      %p99 = por %p97, %p98
      %p100 = scmp.le.s32.totalorder 1, %s12
      %p101 = scmp.lt.s32.totalorder %s12, 7
      %p102 = pnand %p100, %p101
      %p103 = pneg %p102
      // Predicated region
      $region9: #{tpu_custom_call.1} parent=5 // pred_check
        _
      $region10: #{tpu_custom_call.1} parent=5 // pred_check_branch
        %105 = sbr.rel (%p102) target = $region12
      $region11: #{tpu_custom_call.1} parent=5 // pred_region
        %s106 = ssub.s32 %s12, 1
        // Predicated region
        $region13: #{tpu_custom_call.1} parent=11 // pred_check
          %p107 = pneg %p45
        $region14: #{tpu_custom_call.1} parent=11 // pred_check_branch
          %109 = sbr.rel (%p107) target = $region16
        $region15: #{tpu_custom_call.1} parent=11 // pred_region
          _
        $region16: #{tpu_custom_call.1} parent=11 // pred_fallthru
          _
        // Predicated region
        $region17: #{tpu_custom_call.1} parent=11 // pred_check
          %p110 = pneg %p66
        $region18: #{tpu_custom_call.1} parent=11 // pred_check_branch
          %112 = sbr.rel (%p110) target = $region20
        $region19: #{tpu_custom_call.1} parent=11 // pred_region
          _
        $region20: #{tpu_custom_call.1} parent=11 // pred_fallthru
          _
      $region12: #{tpu_custom_call.1} parent=5 // pred_fallthru
        _
      %p113 = scmp.lt.s32.totalorder %s12, 6
      // Predicated region
      $region21: #{tpu_custom_call.1} parent=5 // pred_check
        %p114 = pneg %p113
      $region22: #{tpu_custom_call.1} parent=5 // pred_check_branch
        %116 = sbr.rel (%p114) target = $region24
      $region23: #{tpu_custom_call.1} parent=5 // pred_region
        _
      $region24: #{tpu_custom_call.1} parent=5 // pred_fallthru
        _
      %p117 = scmp.le.s32.totalorder 1, %s12
      %p118 = scmp.lt.s32.totalorder %s12, 7
      %p119 = pnand %p117, %p118
      %p120 = pneg %p119
      // Predicated region
      $region25: #{tpu_custom_call.1} parent=5 // pred_check
        _
      $region26: #{tpu_custom_call.1} parent=5 // pred_check_branch
        %122 = sbr.rel (%p119) target = $region28
      $region27: #{tpu_custom_call.1} parent=5 // pred_region
        %s123 = ssub.s32 %s12, 1
        %p124 = pneg %p45
        %p125 = pneg %p42
        %p126 = pneg %p66
        %p127 = pneg %p63
        %p128 = pneg %p92
        %p129 = pneg %p89
        %s130 = sand.u32 %s79, 1
        %s131 = scalar_lea.sflag [#allocation6], %s130
        %s132 = sand.u32 %s79, 1
        %s133 = smul.addr %s132, 4
        %s134 = scalar_lea.vmem [#allocation5], %s133
        %p136 = scmp.lt.s32.totalorder %s22, 0
        %s137 = ssub.s32 0, %s22
        %s138 = scalar_select %p136, %s137, %s22
        %s139 = sand.u32 %s138, 1
        %s140 = ssub.s32 0, %s139
        %s141 = scalar_select %p136, %s140, %s139
        %s142 = sadd.s32 %s22, 1
        %p143 = scmp.lt.s32.totalorder %s142, 0
        %s144 = ssub.s32 0, %s142
        %s145 = scalar_select %p143, %s144, %s142
        %s146 = sand.u32 %s145, 1
        %s147 = ssub.s32 0, %s146
        %s148 = scalar_select %p143, %s147, %s146
        %p149 = scmp.eq.s32.totalorder %s22, 0
        // Predicated region
        $region29: #{tpu_custom_call.1} parent=27 // pred_check
          %p150 = pneg %p149
        $region30: #{tpu_custom_call.1} parent=27 // pred_check_branch
          %152 = sbr.rel (%p150) target = $region32
        $region31: #{tpu_custom_call.1} parent=27 // pred_region
          %s153 = smul.u32 %s21, 8
          %s154 = smul.addr %s153, 2
          %s155 = scalar_lea.vmem %s0, %s154
          // Predicated region
          $region33: #{tpu_custom_call.1} parent=31 // pred_check
            _
          $region34: #{tpu_custom_call.1} parent=31 // pred_check_branch
            %157 = sbr.rel (0) target = $region36
          $region35: #{tpu_custom_call.1} parent=31 // pred_region
            // Predicated region
            $region48: #{tpu_custom_call.1} parent=35 // pred_check
              _
            $region49: #{tpu_custom_call.1} parent=35 // pred_check_branch
              %173 = sbr.rel (0) target = $region51
            $region50: #{tpu_custom_call.1} parent=35 // pred_region
              loop: start=0, step=1, limit=1
              $region52: #{tpu_custom_call.1} parent=50 // loop_pre_header
                _
              $region53: #{tpu_custom_call.1} parent=50 // loop_header
                %s175 = sphi 0, %s179
                %p176 = scmp.ge.s32.totalorder %s175, 1
                %s180 = sphi %s155, %s155
                %s181 = sphi [#allocation2], [#allocation2]
              $region54: #{tpu_custom_call.1} parent=50 // loop_header_branch
                %178 = sbr.rel (%p176) target = $region58
              $region55: #{tpu_custom_call.1} parent=50 // loop_body
                %v182 = vld [vmem:[%s180] sm:$0xff]
                %183 = vst [vmem:[%s181] sm:$0xff] %v182
              $region56: #{tpu_custom_call.1} parent=50 // loop_footer
                %s179 = sadd.s32 1, %s175
              $region57: #{tpu_custom_call.1} parent=50 // loop_footer_branch
                %174 = sbr.rel target = $region53
              $region58: #{tpu_custom_call.1} parent=50 // loop_exit
                _
            $region51: #{tpu_custom_call.1} parent=35 // pred_fallthru
              _
            // Predicated region
            $region59: #{tpu_custom_call.1} parent=35 // pred_check
              _
            $region60: #{tpu_custom_call.1} parent=35 // pred_check_branch
              %185 = sbr.rel target = $region62
            $region61: #{tpu_custom_call.1} parent=35 // pred_region
              _
            $region62: #{tpu_custom_call.1} parent=35 // pred_fallthru
              _
          $region36: #{tpu_custom_call.1} parent=31 // pred_fallthru
            _
          // Predicated region
          $region37: #{tpu_custom_call.1} parent=31 // pred_check
            _
          $region38: #{tpu_custom_call.1} parent=31 // pred_check_branch
            %159 = sbr.rel target = $region40
          $region39: #{tpu_custom_call.1} parent=31 // pred_region
            %s161 = ssub.s32 256, 1
            loop: start=0, step=1, limit=1
            $region41: #{tpu_custom_call.1} parent=39 // loop_pre_header
              _
            $region42: #{tpu_custom_call.1} parent=39 // loop_header
              %s163 = sphi 0, %s167
              %p164 = scmp.ge.s32.totalorder %s163, 1
              %s168 = sphi %s155, %s155
              %s169 = sphi [#allocation2], [#allocation2]
            $region43: #{tpu_custom_call.1} parent=39 // loop_header_branch
              %166 = sbr.rel (%p164) target = $region47
            $region44: #{tpu_custom_call.1} parent=39 // loop_body
              %v170 = vld [vmem:[%s168] sm:%s161]
              %171 = vst [vmem:[%s169] sm:%s161] %v170
            $region45: #{tpu_custom_call.1} parent=39 // loop_footer
              %s167 = sadd.s32 1, %s163
            $region46: #{tpu_custom_call.1} parent=39 // loop_footer_branch
              %162 = sbr.rel target = $region42
            $region47: #{tpu_custom_call.1} parent=39 // loop_exit
              _
          $region40: #{tpu_custom_call.1} parent=31 // pred_fallthru
            _
          // Predicated region
          $region63: #{tpu_custom_call.1} parent=31 // pred_check
            _
          $region64: #{tpu_custom_call.1} parent=31 // pred_check_branch
            %188 = sbr.rel (0) target = $region66
          $region65: #{tpu_custom_call.1} parent=31 // pred_region
            %189 = vsyncadd [#allocation4], 128
          $region66: #{tpu_custom_call.1} parent=31 // pred_fallthru
            _
        $region32: #{tpu_custom_call.1} parent=27 // pred_fallthru
          _
        %p190 = scmp.lt.s32.totalorder %s142, 3
        // Predicated region
        $region67: #{tpu_custom_call.1} parent=27 // pred_check
          %p191 = pneg %p190
        $region68: #{tpu_custom_call.1} parent=27 // pred_check_branch
          %193 = sbr.rel (%p191) target = $region70
        $region69: #{tpu_custom_call.1} parent=27 // pred_region
          %s194 = smul.u32 %s142, 256
          %s195 = sshra.s32 %s194, 7
          %s196 = sand.u32 %s194, 127
          %s197 = smul.u32 %s21, 8
          %s198 = sadd.s32 %s195, %s197
          %s199 = smul.addr %s198, 2
          %s200 = scalar_lea.vmem %s0, %s199
          %s201 = smul.u32 %s148, 4
          %s202 = smul.addr %s201, 2
          %s203 = scalar_lea.vmem [#allocation2], %s202
          %s204 = scalar_lea.sflag [#allocation4], %s148
          // Predicated region
          $region71: #{tpu_custom_call.1} parent=69 // pred_check
            _
          $region72: #{tpu_custom_call.1} parent=69 // pred_check_branch
            %206 = sbr.rel (0) target = $region74
          $region73: #{tpu_custom_call.1} parent=69 // pred_region
            // Predicated region
            $region86: #{tpu_custom_call.1} parent=73 // pred_check
              _
            $region87: #{tpu_custom_call.1} parent=73 // pred_check_branch
              %222 = sbr.rel (0) target = $region89
            $region88: #{tpu_custom_call.1} parent=73 // pred_region
              loop: start=0, step=1, limit=1
              $region90: #{tpu_custom_call.1} parent=88 // loop_pre_header
                _
              $region91: #{tpu_custom_call.1} parent=88 // loop_header
                %s224 = sphi 0, %s228
                %p225 = scmp.ge.s32.totalorder %s224, 1
                %s229 = sphi %s200, %s200
                %s230 = sphi %s203, %s203
              $region92: #{tpu_custom_call.1} parent=88 // loop_header_branch
                %227 = sbr.rel (%p225) target = $region96
              $region93: #{tpu_custom_call.1} parent=88 // loop_body
                %v231 = vld [vmem:[%s229] sm:$0xff]
                %232 = vst [vmem:[%s230] sm:$0xff] %v231
              $region94: #{tpu_custom_call.1} parent=88 // loop_footer
                %s228 = sadd.s32 1, %s224
              $region95: #{tpu_custom_call.1} parent=88 // loop_footer_branch
                %223 = sbr.rel target = $region91
              $region96: #{tpu_custom_call.1} parent=88 // loop_exit
                _
            $region89: #{tpu_custom_call.1} parent=73 // pred_fallthru
              _
            // Predicated region
            $region97: #{tpu_custom_call.1} parent=73 // pred_check
              _
            $region98: #{tpu_custom_call.1} parent=73 // pred_check_branch
              %234 = sbr.rel target = $region100
            $region99: #{tpu_custom_call.1} parent=73 // pred_region
              _
            $region100: #{tpu_custom_call.1} parent=73 // pred_fallthru
              _
          $region74: #{tpu_custom_call.1} parent=69 // pred_fallthru
            _
          // Predicated region
          $region75: #{tpu_custom_call.1} parent=69 // pred_check
            _
          $region76: #{tpu_custom_call.1} parent=69 // pred_check_branch
            %208 = sbr.rel target = $region78
          $region77: #{tpu_custom_call.1} parent=69 // pred_region
            %s210 = ssub.s32 256, 1
            loop: start=0, step=1, limit=1
            $region79: #{tpu_custom_call.1} parent=77 // loop_pre_header
              _
            $region80: #{tpu_custom_call.1} parent=77 // loop_header
              %s212 = sphi 0, %s216
              %p213 = scmp.ge.s32.totalorder %s212, 1
              %s217 = sphi %s200, %s200
              %s218 = sphi %s203, %s203
            $region81: #{tpu_custom_call.1} parent=77 // loop_header_branch
              %215 = sbr.rel (%p213) target = $region85
            $region82: #{tpu_custom_call.1} parent=77 // loop_body
              %v219 = vld [vmem:[%s217] sm:%s210]
              %220 = vst [vmem:[%s218] sm:%s210] %v219
            $region83: #{tpu_custom_call.1} parent=77 // loop_footer
              %s216 = sadd.s32 1, %s212
            $region84: #{tpu_custom_call.1} parent=77 // loop_footer_branch
              %211 = sbr.rel target = $region80
            $region85: #{tpu_custom_call.1} parent=77 // loop_exit
              _
          $region78: #{tpu_custom_call.1} parent=69 // pred_fallthru
            _
          // Predicated region
          $region101: #{tpu_custom_call.1} parent=69 // pred_check
            _
          $region102: #{tpu_custom_call.1} parent=69 // pred_check_branch
            %237 = sbr.rel (0) target = $region104
          $region103: #{tpu_custom_call.1} parent=69 // pred_region
            %238 = vsyncadd %s204, 128
          $region104: #{tpu_custom_call.1} parent=69 // pred_fallthru
            _
        $region70: #{tpu_custom_call.1} parent=27 // pred_fallthru
          _
        // Predicated region
        $region105: #{tpu_custom_call.1} parent=27 // pred_check
          %p239 = pneg %p149
        $region106: #{tpu_custom_call.1} parent=27 // pred_check_branch
          %241 = sbr.rel (%p239) target = $region108
        $region107: #{tpu_custom_call.1} parent=27 // pred_region
          %vm242 = vcmask 60416
          %243 = vst.msk [vmem:[%s134] sm:$0xf] %vm242, 0.0
        $region108: #{tpu_custom_call.1} parent=27 // pred_fallthru
          _
        %s244 = smul.u32 %s141, 4
        %s245 = smul.addr %s244, 2
        %s246 = scalar_lea.vmem [#allocation2], %s245
        %s247 = scalar_lea.sflag [#allocation4], %s141
        %s248 = smul.u32 2, 1
        %s249 = smul.u32 %s248, 4
        %s250 = sshll.u32 %s249, 4
        %251 = dma.done %s247, %s250
        %v252 = vld [vmem:[%s246] sm:$0xff]
        %v253 = vld [vmem:[%s1] sm:$0xf]
        %v254 = vld [vmem:[%s1 + $0x4] sm:$0xf]
        %v255 = vld [vmem:[%s1 + $0x8] sm:$0xf]
        %v256 = vld [vmem:[%s1 + $0xc] sm:$0xf]
        %v257 = vld [vmem:[%s1 + $0x10] sm:$0xf]
        %v258 = vld [vmem:[%s1 + $0x14] sm:$0xf]
        %v259 = vld [vmem:[%s1 + $0x18] sm:$0xf]
        %v260 = vld [vmem:[%s1 + $0x1c] sm:$0xf]
        %v261 = vld [vmem:[%s1 + $0x20] sm:$0xf]
        %v262 = vld [vmem:[%s1 + $0x24] sm:$0xf]
        %v263 = vld [vmem:[%s1 + $0x28] sm:$0xf]
        %v264 = vld [vmem:[%s1 + $0x2c] sm:$0xf]
        %v265 = vld [vmem:[%s1 + $0x30] sm:$0xf]
        %v266 = vld [vmem:[%s1 + $0x34] sm:$0xf]
        %v267 = vld [vmem:[%s1 + $0x38] sm:$0xf]
        %v268 = vld [vmem:[%s1 + $0x3c] sm:$0xf]
        %v269 = vld [vmem:[%s1 + $0x40] sm:$0xf]
        %v270 = vld [vmem:[%s1 + $0x44] sm:$0xf]
        %v271 = vld [vmem:[%s1 + $0x48] sm:$0xf]
        %v272 = vld [vmem:[%s1 + $0x4c] sm:$0xf]
        %v273 = vld [vmem:[%s1 + $0x50] sm:$0xf]
        %v274 = vld [vmem:[%s1 + $0x54] sm:$0xf]
        %v275 = vld [vmem:[%s1 + $0x58] sm:$0xf]
        %v276 = vld [vmem:[%s1 + $0x5c] sm:$0xf]
        %v277 = vld [vmem:[%s1 + $0x60] sm:$0xf]
        %v278 = vld [vmem:[%s1 + $0x64] sm:$0xf]
        %v279 = vld [vmem:[%s1 + $0x68] sm:$0xf]
        %v307 = vunpack.c.l.b16 %v253
        %v308 = vunpack.c.l.b16 %v254
        %v309 = vunpack.c.l.b16 %v255
        %v310 = vunpack.c.l.b16 %v256
        %v311 = vunpack.c.l.b16 %v257
        %v312 = vunpack.c.l.b16 %v258
        %v313 = vunpack.c.l.b16 %v259
        %v314 = vunpack.c.l.b16 %v260
        %v315 = vunpack.c.l.b16 %v261
        %v316 = vunpack.c.l.b16 %v262
        %v317 = vunpack.c.l.b16 %v263
        %v318 = vunpack.c.l.b16 %v264
        %v319 = vunpack.c.l.b16 %v265
        %v320 = vunpack.c.l.b16 %v266
        %v321 = vunpack.c.l.b16 %v267
        %v322 = vunpack.c.l.b16 %v268
        %v323 = vunpack.c.l.b16 %v269
        %v324 = vunpack.c.l.b16 %v270
        %v325 = vunpack.c.l.b16 %v271
        %v326 = vunpack.c.l.b16 %v272
        %v327 = vunpack.c.l.b16 %v273
        %v328 = vunpack.c.l.b16 %v274
        %v329 = vunpack.c.l.b16 %v275
        %v330 = vunpack.c.l.b16 %v276
        %v331 = vunpack.c.l.b16 %v277
        %v332 = vunpack.c.l.b16 %v278
        %v333 = vunpack.c.l.b16 %v279
        %v334 = vpack.c.b16 %v308, %v307
        %v335 = vpack.c.b16 %v310, %v309
        %v336 = vpack.c.b16 %v312, %v311
        %v337 = vpack.c.b16 %v314, %v313
        %v338 = vpack.c.b16 %v316, %v315
        %v339 = vpack.c.b16 %v318, %v317
        %v340 = vpack.c.b16 %v320, %v319
        %v341 = vpack.c.b16 %v322, %v321
        %v342 = vpack.c.b16 %v324, %v323
        %v343 = vpack.c.b16 %v326, %v325
        %v344 = vpack.c.b16 %v328, %v327
        %v345 = vpack.c.b16 %v330, %v329
        %v346 = vpack.c.b16 %v332, %v331
        %v347 = vpack.c.b16 %v333, %v333
        %349 = vst [vmem:[#allocation1] ss:$4 sm:$0xff] %v252
        %v350 = vld.sshfl [vmem:[#allocation1] sm:$0xff pattern:$0x73625140]
        %v351 = vld.sshfl [vmem:[#allocation1 + $0x8] sm:$0xff pattern:$0x73625140]
        %v352 = vld.sshfl [vmem:[#allocation1 + $0x10] sm:$0xff pattern:$0x73625140]
        %v353 = vld.sshfl [vmem:[#allocation1 + $0x18] sm:$0xff pattern:$0x73625140]
        %vm354 = vcmask 31744
        %v356 = vsel %vm354, %v334, 0
        %v359 = vsel %vm354, %v335, 0
        %v362 = vsel %vm354, %v336, 0
        %v365 = vsel %vm354, %v337, 0
        %v368 = vsel %vm354, %v338, 0
        %v371 = vsel %vm354, %v339, 0
        %v374 = vsel %vm354, %v340, 0
        %v377 = vsel %vm354, %v341, 0
        %v380 = vsel %vm354, %v342, 0
        %v383 = vsel %vm354, %v343, 0
        %v386 = vsel %vm354, %v344, 0
        %v389 = vsel %vm354, %v345, 0
        %v392 = vsel %vm354, %v346, 0
        %v395 = vsel %vm354, %v347, 0
        %vm397 = vcmask 1041408
        %v398 = vsel %vm397, %v350, 0
        %v400 = vsel %vm397, %v351, 0
        %v402 = vsel %vm397, %v352, 0
        %v404 = vsel %vm397, %v353, 0
        %406 = vmatpush.bf16.msra.mxu0 0
        %407 = vmatpush.bf16.msra.mxu0 0
        %408 = vmatpush.bf16.msra.mxu0 0
        %409 = vmatpush.bf16.msra.mxu0 0
        %410 = vmatpush.bf16.msra.mxu0 0
        %411 = vmatpush.bf16.msra.mxu0 0
        %412 = vmatpush.bf16.msra.mxu0 0
        %413 = vmatpush.bf16.msra.mxu0 %v398
        %414 = vmatmul.bf16.gmra.mxu0 %v356
        %v415 = vpop.f32.mrf.mxu0
        %v416 = vadd.f32 0.0, %v415
        %v417 = vpop.f32.mrf.mxu0
        %v418 = vadd.f32 0.0, %v417
        %419 = vmatmul.bf16.gmra.mxu0 %v359
        %v420 = vpop.f32.mrf.mxu0
        %v421 = vadd.f32 0.0, %v420
        %v422 = vpop.f32.mrf.mxu0
        %v423 = vadd.f32 0.0, %v422
        %424 = vmatmul.bf16.gmra.mxu0 %v362
        %v425 = vpop.f32.mrf.mxu0
        %v426 = vadd.f32 0.0, %v425
        %v427 = vpop.f32.mrf.mxu0
        %v428 = vadd.f32 0.0, %v427
        %429 = vmatmul.bf16.gmra.mxu0 %v365
        %v430 = vpop.f32.mrf.mxu0
        %v431 = vadd.f32 0.0, %v430
        %v432 = vpop.f32.mrf.mxu0
        %v433 = vadd.f32 0.0, %v432
        %434 = vmatmul.bf16.gmra.mxu0 %v368
        %v435 = vpop.f32.mrf.mxu0
        %v436 = vadd.f32 0.0, %v435
        %v437 = vpop.f32.mrf.mxu0
        %v438 = vadd.f32 0.0, %v437
        %439 = vmatmul.bf16.gmra.mxu0 %v371
        %v440 = vpop.f32.mrf.mxu0
        %v441 = vadd.f32 0.0, %v440
        %v442 = vpop.f32.mrf.mxu0
        %v443 = vadd.f32 0.0, %v442
        %444 = vmatmul.bf16.gmra.mxu0 %v374
        %v445 = vpop.f32.mrf.mxu0
        %v446 = vadd.f32 0.0, %v445
        %v447 = vpop.f32.mrf.mxu0
        %v448 = vadd.f32 0.0, %v447
        %449 = vmatmul.bf16.gmra.mxu0 %v377
        %v450 = vpop.f32.mrf.mxu0
        %v451 = vadd.f32 0.0, %v450
        %v452 = vpop.f32.mrf.mxu0
        %v453 = vadd.f32 0.0, %v452
        %454 = vmatmul.bf16.gmra.mxu0 %v380
        %v455 = vpop.f32.mrf.mxu0
        %v456 = vadd.f32 0.0, %v455
        %v457 = vpop.f32.mrf.mxu0
        %v458 = vadd.f32 0.0, %v457
        %459 = vmatmul.bf16.gmra.mxu0 %v383
        %v460 = vpop.f32.mrf.mxu0
        %v461 = vadd.f32 0.0, %v460
        %v462 = vpop.f32.mrf.mxu0
        %v463 = vadd.f32 0.0, %v462
        %464 = vmatmul.bf16.gmra.mxu0 %v386
        %v465 = vpop.f32.mrf.mxu0
        %v466 = vadd.f32 0.0, %v465
        %v467 = vpop.f32.mrf.mxu0
        %v468 = vadd.f32 0.0, %v467
        %469 = vmatmul.bf16.gmra.mxu0 %v389
        %v470 = vpop.f32.mrf.mxu0
        %v471 = vadd.f32 0.0, %v470
        %v472 = vpop.f32.mrf.mxu0
        %v473 = vadd.f32 0.0, %v472
        %474 = vmatmul.bf16.gmra.mxu0 %v392
        %v475 = vpop.f32.mrf.mxu0
        %v476 = vadd.f32 0.0, %v475
        %v477 = vpop.f32.mrf.mxu0
        %v478 = vadd.f32 0.0, %v477
        %479 = vmatmul.bf16.gmra.mxu0 %v395
        %v480 = vpop.f32.mrf.mxu0
        %v481 = vadd.f32 0.0, %v480
        %v482 = vpop.f32.mrf.mxu0
        %483 = vdwg.mxu0
        %484 = vmatpush.bf16.msra.mxu0 0
        %485 = vmatpush.bf16.msra.mxu0 0
        %486 = vmatpush.bf16.msra.mxu0 0
        %487 = vmatpush.bf16.msra.mxu0 0
        %488 = vmatpush.bf16.msra.mxu0 0
        %489 = vmatpush.bf16.msra.mxu0 0
        %490 = vmatpush.bf16.msra.mxu0 0
        %491 = vmatpush.bf16.msra.mxu0 %v400
        %492 = vmatmul.bf16.gmra.mxu0 %v356
        %v493 = vpop.f32.mrf.mxu0
        %v494 = vadd.f32 0.0, %v493
        %v495 = vpop.f32.mrf.mxu0
        %v496 = vadd.f32 0.0, %v495
        %497 = vmatmul.bf16.gmra.mxu0 %v359
        %v498 = vpop.f32.mrf.mxu0
        %v499 = vadd.f32 0.0, %v498
        %v500 = vpop.f32.mrf.mxu0
        %v501 = vadd.f32 0.0, %v500
        %502 = vmatmul.bf16.gmra.mxu0 %v362
        %v503 = vpop.f32.mrf.mxu0
        %v504 = vadd.f32 0.0, %v503
        %v505 = vpop.f32.mrf.mxu0
        %v506 = vadd.f32 0.0, %v505
        %507 = vmatmul.bf16.gmra.mxu0 %v365
        %v508 = vpop.f32.mrf.mxu0
        %v509 = vadd.f32 0.0, %v508
        %v510 = vpop.f32.mrf.mxu0
        %v511 = vadd.f32 0.0, %v510
        %512 = vmatmul.bf16.gmra.mxu0 %v368
        %v513 = vpop.f32.mrf.mxu0
        %v514 = vadd.f32 0.0, %v513
        %v515 = vpop.f32.mrf.mxu0
        %v516 = vadd.f32 0.0, %v515
        %517 = vmatmul.bf16.gmra.mxu0 %v371
        %v518 = vpop.f32.mrf.mxu0
        %v519 = vadd.f32 0.0, %v518
        %v520 = vpop.f32.mrf.mxu0
        %v521 = vadd.f32 0.0, %v520
        %522 = vmatmul.bf16.gmra.mxu0 %v374
        %v523 = vpop.f32.mrf.mxu0
        %v524 = vadd.f32 0.0, %v523
        %v525 = vpop.f32.mrf.mxu0
        %v526 = vadd.f32 0.0, %v525
        %527 = vmatmul.bf16.gmra.mxu0 %v377
        %v528 = vpop.f32.mrf.mxu0
        %v529 = vadd.f32 0.0, %v528
        %v530 = vpop.f32.mrf.mxu0
        %v531 = vadd.f32 0.0, %v530
        %532 = vmatmul.bf16.gmra.mxu0 %v380
        %v533 = vpop.f32.mrf.mxu0
        %v534 = vadd.f32 0.0, %v533
        %v535 = vpop.f32.mrf.mxu0
        %v536 = vadd.f32 0.0, %v535
        %537 = vmatmul.bf16.gmra.mxu0 %v383
        %v538 = vpop.f32.mrf.mxu0
        %v539 = vadd.f32 0.0, %v538
        %v540 = vpop.f32.mrf.mxu0
        %v541 = vadd.f32 0.0, %v540
        %542 = vmatmul.bf16.gmra.mxu0 %v386
        %v543 = vpop.f32.mrf.mxu0
        %v544 = vadd.f32 0.0, %v543
        %v545 = vpop.f32.mrf.mxu0
        %v546 = vadd.f32 0.0, %v545
        %547 = vmatmul.bf16.gmra.mxu0 %v389
        %v548 = vpop.f32.mrf.mxu0
        %v549 = vadd.f32 0.0, %v548
        %v550 = vpop.f32.mrf.mxu0
        %v551 = vadd.f32 0.0, %v550
        %552 = vmatmul.bf16.gmra.mxu0 %v392
        %v553 = vpop.f32.mrf.mxu0
        %v554 = vadd.f32 0.0, %v553
        %v555 = vpop.f32.mrf.mxu0
        %v556 = vadd.f32 0.0, %v555
        %557 = vmatmul.bf16.gmra.mxu0 %v395
        %v558 = vpop.f32.mrf.mxu0
        %v559 = vadd.f32 0.0, %v558
        %v560 = vpop.f32.mrf.mxu0
        %561 = vdwg.mxu0
        %562 = vmatpush.bf16.msra.mxu0 0
        %563 = vmatpush.bf16.msra.mxu0 0
        %564 = vmatpush.bf16.msra.mxu0 0
        %565 = vmatpush.bf16.msra.mxu0 0
        %566 = vmatpush.bf16.msra.mxu0 0
        %567 = vmatpush.bf16.msra.mxu0 0
        %568 = vmatpush.bf16.msra.mxu0 0
        %569 = vmatpush.bf16.msra.mxu0 %v402
        %570 = vmatmul.bf16.gmra.mxu0 %v356
        %v571 = vpop.f32.mrf.mxu0
        %v572 = vadd.f32 0.0, %v571
        %v573 = vpop.f32.mrf.mxu0
        %v574 = vadd.f32 0.0, %v573
        %575 = vmatmul.bf16.gmra.mxu0 %v359
        %v576 = vpop.f32.mrf.mxu0
        %v577 = vadd.f32 0.0, %v576
        %v578 = vpop.f32.mrf.mxu0
        %v579 = vadd.f32 0.0, %v578
        %580 = vmatmul.bf16.gmra.mxu0 %v362
        %v581 = vpop.f32.mrf.mxu0
        %v582 = vadd.f32 0.0, %v581
        %v583 = vpop.f32.mrf.mxu0
        %v584 = vadd.f32 0.0, %v583
        %585 = vmatmul.bf16.gmra.mxu0 %v365
        %v586 = vpop.f32.mrf.mxu0
        %v587 = vadd.f32 0.0, %v586
        %v588 = vpop.f32.mrf.mxu0
        %v589 = vadd.f32 0.0, %v588
        %590 = vmatmul.bf16.gmra.mxu0 %v368
        %v591 = vpop.f32.mrf.mxu0
        %v592 = vadd.f32 0.0, %v591
        %v593 = vpop.f32.mrf.mxu0
        %v594 = vadd.f32 0.0, %v593
        %595 = vmatmul.bf16.gmra.mxu0 %v371
        %v596 = vpop.f32.mrf.mxu0
        %v597 = vadd.f32 0.0, %v596
        %v598 = vpop.f32.mrf.mxu0
        %v599 = vadd.f32 0.0, %v598
        %600 = vmatmul.bf16.gmra.mxu0 %v374
        %v601 = vpop.f32.mrf.mxu0
        %v602 = vadd.f32 0.0, %v601
        %v603 = vpop.f32.mrf.mxu0
        %v604 = vadd.f32 0.0, %v603
        %605 = vmatmul.bf16.gmra.mxu0 %v377
        %v606 = vpop.f32.mrf.mxu0
        %v607 = vadd.f32 0.0, %v606
        %v608 = vpop.f32.mrf.mxu0
        %v609 = vadd.f32 0.0, %v608
        %610 = vmatmul.bf16.gmra.mxu0 %v380
        %v611 = vpop.f32.mrf.mxu0
        %v612 = vadd.f32 0.0, %v611
        %v613 = vpop.f32.mrf.mxu0
        %v614 = vadd.f32 0.0, %v613
        %615 = vmatmul.bf16.gmra.mxu0 %v383
        %v616 = vpop.f32.mrf.mxu0
        %v617 = vadd.f32 0.0, %v616
        %v618 = vpop.f32.mrf.mxu0
        %v619 = vadd.f32 0.0, %v618
        %620 = vmatmul.bf16.gmra.mxu0 %v386
        %v621 = vpop.f32.mrf.mxu0
        %v622 = vadd.f32 0.0, %v621
        %v623 = vpop.f32.mrf.mxu0
        %v624 = vadd.f32 0.0, %v623
        %625 = vmatmul.bf16.gmra.mxu0 %v389
        %v626 = vpop.f32.mrf.mxu0
        %v627 = vadd.f32 0.0, %v626
        %v628 = vpop.f32.mrf.mxu0
        %v629 = vadd.f32 0.0, %v628
        %630 = vmatmul.bf16.gmra.mxu0 %v392
        %v631 = vpop.f32.mrf.mxu0
        %v632 = vadd.f32 0.0, %v631
        %v633 = vpop.f32.mrf.mxu0
        %v634 = vadd.f32 0.0, %v633
        %635 = vmatmul.bf16.gmra.mxu0 %v395
        %v636 = vpop.f32.mrf.mxu0
        %v637 = vadd.f32 0.0, %v636
        %v638 = vpop.f32.mrf.mxu0
        %639 = vdwg.mxu0
        %640 = vmatpush.bf16.msra.mxu0 0
        %641 = vmatpush.bf16.msra.mxu0 0
        %642 = vmatpush.bf16.msra.mxu0 0
        %643 = vmatpush.bf16.msra.mxu0 0
        %644 = vmatpush.bf16.msra.mxu0 0
        %645 = vmatpush.bf16.msra.mxu0 0
        %646 = vmatpush.bf16.msra.mxu0 0
        %647 = vmatpush.bf16.msra.mxu0 %v404
        %648 = vmatmul.bf16.gmra.mxu0 %v356
        %v649 = vpop.f32.mrf.mxu0
        %v650 = vadd.f32 0.0, %v649
        %v651 = vpop.f32.mrf.mxu0
        %v652 = vadd.f32 0.0, %v651
        %653 = vmatmul.bf16.gmra.mxu0 %v359
        %v654 = vpop.f32.mrf.mxu0
        %v655 = vadd.f32 0.0, %v654
        %v656 = vpop.f32.mrf.mxu0
        %v657 = vadd.f32 0.0, %v656
        %658 = vmatmul.bf16.gmra.mxu0 %v362
        %v659 = vpop.f32.mrf.mxu0
        %v660 = vadd.f32 0.0, %v659
        %v661 = vpop.f32.mrf.mxu0
        %v662 = vadd.f32 0.0, %v661
        %663 = vmatmul.bf16.gmra.mxu0 %v365
        %v664 = vpop.f32.mrf.mxu0
        %v665 = vadd.f32 0.0, %v664
        %v666 = vpop.f32.mrf.mxu0
        %v667 = vadd.f32 0.0, %v666
        %668 = vmatmul.bf16.gmra.mxu0 %v368
        %v669 = vpop.f32.mrf.mxu0
        %v670 = vadd.f32 0.0, %v669
        %v671 = vpop.f32.mrf.mxu0
        %v672 = vadd.f32 0.0, %v671
        %673 = vmatmul.bf16.gmra.mxu0 %v371
        %v674 = vpop.f32.mrf.mxu0
        %v675 = vadd.f32 0.0, %v674
        %v676 = vpop.f32.mrf.mxu0
        %v677 = vadd.f32 0.0, %v676
        %678 = vmatmul.bf16.gmra.mxu0 %v374
        %v679 = vpop.f32.mrf.mxu0
        %v680 = vadd.f32 0.0, %v679
        %v681 = vpop.f32.mrf.mxu0
        %v682 = vadd.f32 0.0, %v681
        %683 = vmatmul.bf16.gmra.mxu0 %v377
        %v684 = vpop.f32.mrf.mxu0
        %v685 = vadd.f32 0.0, %v684
        %v686 = vpop.f32.mrf.mxu0
        %v687 = vadd.f32 0.0, %v686
        %688 = vmatmul.bf16.gmra.mxu0 %v380
        %v689 = vpop.f32.mrf.mxu0
        %v690 = vadd.f32 0.0, %v689
        %v691 = vpop.f32.mrf.mxu0
        %v692 = vadd.f32 0.0, %v691
        %693 = vmatmul.bf16.gmra.mxu0 %v383
        %v694 = vpop.f32.mrf.mxu0
        %v695 = vadd.f32 0.0, %v694
        %v696 = vpop.f32.mrf.mxu0
        %v697 = vadd.f32 0.0, %v696
        %698 = vmatmul.bf16.gmra.mxu0 %v386
        %v699 = vpop.f32.mrf.mxu0
        %v700 = vadd.f32 0.0, %v699
        %v701 = vpop.f32.mrf.mxu0
        %v702 = vadd.f32 0.0, %v701
        %703 = vmatmul.bf16.gmra.mxu0 %v389
        %v704 = vpop.f32.mrf.mxu0
        %v705 = vadd.f32 0.0, %v704
        %v706 = vpop.f32.mrf.mxu0
        %v707 = vadd.f32 0.0, %v706
        %708 = vmatmul.bf16.gmra.mxu0 %v392
        %v709 = vpop.f32.mrf.mxu0
        %v710 = vadd.f32 0.0, %v709
        %v711 = vpop.f32.mrf.mxu0
        %v712 = vadd.f32 0.0, %v711
        %713 = vmatmul.bf16.gmra.mxu0 %v395
        %v714 = vpop.f32.mrf.mxu0
        %v715 = vadd.f32 0.0, %v714
        %v716 = vpop.f32.mrf.mxu0
        %717 = vdwg.mxu0
        %718 = vst [vmem:[#allocation3] sm:$0xff] %v416
        %719 = vst [vmem:[#allocation3 + $0x8] sm:$0xff] %v494
        %720 = vst [vmem:[#allocation3 + $0x10] sm:$0xff] %v572
        %721 = vst [vmem:[#allocation3 + $0x18] sm:$0xff] %v650
        %722 = vst [vmem:[#allocation3 + $0x20] sm:$0xff] %v418
        %723 = vst [vmem:[#allocation3 + $0x28] sm:$0xff] %v496
        %724 = vst [vmem:[#allocation3 + $0x30] sm:$0xff] %v574
        %725 = vst [vmem:[#allocation3 + $0x38] sm:$0xff] %v652
        %726 = vst [vmem:[#allocation3 + $0x40] sm:$0xff] %v421
        %727 = vst [vmem:[#allocation3 + $0x48] sm:$0xff] %v499
        %728 = vst [vmem:[#allocation3 + $0x50] sm:$0xff] %v577
        %729 = vst [vmem:[#allocation3 + $0x58] sm:$0xff] %v655
        %730 = vst [vmem:[#allocation3 + $0x60] sm:$0xff] %v423
        %731 = vst [vmem:[#allocation3 + $0x68] sm:$0xff] %v501
        %732 = vst [vmem:[#allocation3 + $0x70] sm:$0xff] %v579
        %733 = vst [vmem:[#allocation3 + $0x78] sm:$0xff] %v657
        %734 = vst [vmem:[#allocation3 + $0x80] sm:$0xff] %v426
        %735 = vst [vmem:[#allocation3 + $0x88] sm:$0xff] %v504
        %736 = vst [vmem:[#allocation3 + $0x90] sm:$0xff] %v582
        %737 = vst [vmem:[#allocation3 + $0x98] sm:$0xff] %v660
        %738 = vst [vmem:[#allocation3 + $0xa0] sm:$0xff] %v428
        %739 = vst [vmem:[#allocation3 + $0xa8] sm:$0xff] %v506
        %740 = vst [vmem:[#allocation3 + $0xb0] sm:$0xff] %v584
        %741 = vst [vmem:[#allocation3 + $0xb8] sm:$0xff] %v662
        %742 = vst [vmem:[#allocation3 + $0xc0] sm:$0xff] %v431
        %743 = vst [vmem:[#allocation3 + $0xc8] sm:$0xff] %v509
        %744 = vst [vmem:[#allocation3 + $0xd0] sm:$0xff] %v587
        %745 = vst [vmem:[#allocation3 + $0xd8] sm:$0xff] %v665
        %746 = vst [vmem:[#allocation3 + $0xe0] sm:$0xff] %v433
        %747 = vst [vmem:[#allocation3 + $0xe8] sm:$0xff] %v511
        %748 = vst [vmem:[#allocation3 + $0xf0] sm:$0xff] %v589
        %749 = vst [vmem:[#allocation3 + $0xf8] sm:$0xff] %v667
        %750 = vst [vmem:[#allocation3 + $0x100] sm:$0xff] %v436
        %751 = vst [vmem:[#allocation3 + $0x108] sm:$0xff] %v514
        %752 = vst [vmem:[#allocation3 + $0x110] sm:$0xff] %v592
        %753 = vst [vmem:[#allocation3 + $0x118] sm:$0xff] %v670
        %754 = vst [vmem:[#allocation3 + $0x120] sm:$0xff] %v438
        %755 = vst [vmem:[#allocation3 + $0x128] sm:$0xff] %v516
        %756 = vst [vmem:[#allocation3 + $0x130] sm:$0xff] %v594
        %757 = vst [vmem:[#allocation3 + $0x138] sm:$0xff] %v672
        %758 = vst [vmem:[#allocation3 + $0x140] sm:$0xff] %v441
        %759 = vst [vmem:[#allocation3 + $0x148] sm:$0xff] %v519
        %760 = vst [vmem:[#allocation3 + $0x150] sm:$0xff] %v597
        %761 = vst [vmem:[#allocation3 + $0x158] sm:$0xff] %v675
        %762 = vst [vmem:[#allocation3 + $0x160] sm:$0xff] %v443
        %763 = vst [vmem:[#allocation3 + $0x168] sm:$0xff] %v521
        %764 = vst [vmem:[#allocation3 + $0x170] sm:$0xff] %v599
        %765 = vst [vmem:[#allocation3 + $0x178] sm:$0xff] %v677
        %766 = vst [vmem:[#allocation3 + $0x180] sm:$0xff] %v446
        %767 = vst [vmem:[#allocation3 + $0x188] sm:$0xff] %v524
        %768 = vst [vmem:[#allocation3 + $0x190] sm:$0xff] %v602
        %769 = vst [vmem:[#allocation3 + $0x198] sm:$0xff] %v680
        %770 = vst [vmem:[#allocation3 + $0x1a0] sm:$0xff] %v448
        %771 = vst [vmem:[#allocation3 + $0x1a8] sm:$0xff] %v526
        %772 = vst [vmem:[#allocation3 + $0x1b0] sm:$0xff] %v604
        %773 = vst [vmem:[#allocation3 + $0x1b8] sm:$0xff] %v682
        %774 = vst [vmem:[#allocation3 + $0x1c0] sm:$0xff] %v451
        %775 = vst [vmem:[#allocation3 + $0x1c8] sm:$0xff] %v529
        %776 = vst [vmem:[#allocation3 + $0x1d0] sm:$0xff] %v607
        %777 = vst [vmem:[#allocation3 + $0x1d8] sm:$0xff] %v685
        %778 = vst [vmem:[#allocation3 + $0x1e0] sm:$0xff] %v453
        %779 = vst [vmem:[#allocation3 + $0x1e8] sm:$0xff] %v531
        %780 = vst [vmem:[#allocation3 + $0x1f0] sm:$0xff] %v609
        %781 = vst [vmem:[#allocation3 + $0x1f8] sm:$0xff] %v687
        %782 = vst [vmem:[#allocation3 + $0x200] sm:$0xff] %v456
        %783 = vst [vmem:[#allocation3 + $0x208] sm:$0xff] %v534
        %784 = vst [vmem:[#allocation3 + $0x210] sm:$0xff] %v612
        %785 = vst [vmem:[#allocation3 + $0x218] sm:$0xff] %v690
        %786 = vst [vmem:[#allocation3 + $0x220] sm:$0xff] %v458
        %787 = vst [vmem:[#allocation3 + $0x228] sm:$0xff] %v536
        %788 = vst [vmem:[#allocation3 + $0x230] sm:$0xff] %v614
        %789 = vst [vmem:[#allocation3 + $0x238] sm:$0xff] %v692
        %790 = vst [vmem:[#allocation3 + $0x240] sm:$0xff] %v461
        %791 = vst [vmem:[#allocation3 + $0x248] sm:$0xff] %v539
        %792 = vst [vmem:[#allocation3 + $0x250] sm:$0xff] %v617
        %793 = vst [vmem:[#allocation3 + $0x258] sm:$0xff] %v695
        %794 = vst [vmem:[#allocation3 + $0x260] sm:$0xff] %v463
        %795 = vst [vmem:[#allocation3 + $0x268] sm:$0xff] %v541
        %796 = vst [vmem:[#allocation3 + $0x270] sm:$0xff] %v619
        %797 = vst [vmem:[#allocation3 + $0x278] sm:$0xff] %v697
        %798 = vst [vmem:[#allocation3 + $0x280] sm:$0xff] %v466
        %799 = vst [vmem:[#allocation3 + $0x288] sm:$0xff] %v544
        %800 = vst [vmem:[#allocation3 + $0x290] sm:$0xff] %v622
        %801 = vst [vmem:[#allocation3 + $0x298] sm:$0xff] %v700
        %802 = vst [vmem:[#allocation3 + $0x2a0] sm:$0xff] %v468
        %803 = vst [vmem:[#allocation3 + $0x2a8] sm:$0xff] %v546
        %804 = vst [vmem:[#allocation3 + $0x2b0] sm:$0xff] %v624
        %805 = vst [vmem:[#allocation3 + $0x2b8] sm:$0xff] %v702
        %806 = vst [vmem:[#allocation3 + $0x2c0] sm:$0xff] %v471
        %807 = vst [vmem:[#allocation3 + $0x2c8] sm:$0xff] %v549
        %808 = vst [vmem:[#allocation3 + $0x2d0] sm:$0xff] %v627
        %809 = vst [vmem:[#allocation3 + $0x2d8] sm:$0xff] %v705
        %810 = vst [vmem:[#allocation3 + $0x2e0] sm:$0xff] %v473
        %811 = vst [vmem:[#allocation3 + $0x2e8] sm:$0xff] %v551
        %812 = vst [vmem:[#allocation3 + $0x2f0] sm:$0xff] %v629
        %813 = vst [vmem:[#allocation3 + $0x2f8] sm:$0xff] %v707
        %814 = vst [vmem:[#allocation3 + $0x300] sm:$0xff] %v476
        %815 = vst [vmem:[#allocation3 + $0x308] sm:$0xff] %v554
        %816 = vst [vmem:[#allocation3 + $0x310] sm:$0xff] %v632
        %817 = vst [vmem:[#allocation3 + $0x318] sm:$0xff] %v710
        %818 = vst [vmem:[#allocation3 + $0x320] sm:$0xff] %v478
        %819 = vst [vmem:[#allocation3 + $0x328] sm:$0xff] %v556
        %820 = vst [vmem:[#allocation3 + $0x330] sm:$0xff] %v634
        %821 = vst [vmem:[#allocation3 + $0x338] sm:$0xff] %v712
        %822 = vst [vmem:[#allocation3 + $0x340] sm:$0xff] %v481
        %823 = vst [vmem:[#allocation3 + $0x348] sm:$0xff] %v559
        %824 = vst [vmem:[#allocation3 + $0x350] sm:$0xff] %v637
        %825 = vst [vmem:[#allocation3 + $0x358] sm:$0xff] %v715
        %v826 = vld [vmem:[#allocation3] sm:$0xff]
        %v827 = vld [vmem:[#allocation3 + $0x8] sm:$0xff]
        %v828 = vld [vmem:[#allocation3 + $0x10] sm:$0xff]
        %v829 = vadd.f32 %v826, 0.0
        %v830 = vadd.f32 %v827, 0.0
        %v831 = vadd.f32 %v828, 0.0
        %v832 = vld [vmem:[#allocation3 + $0x20] sm:$0xff]
        %v833 = vld [vmem:[#allocation3 + $0x28] sm:$0xff]
        %v834 = vld [vmem:[#allocation3 + $0x30] sm:$0xff]
        %838 = vrot.lane.b32.xlu0 %v832, 127
        %v839 = vpop.permute.xlu0 %838
        %840 = vrot.lane.b32.xlu0 %v833, 127
        %v841 = vpop.permute.xlu0 %840
        %842 = vrot.lane.b32.xlu0 %v834, 127
        %v843 = vpop.permute.xlu0 %842
        %vm844 = vcmask 1039360
        %v845 = vsel %vm844, %v839, %v841
        %v846 = vsel %vm844, %v841, %v843
        %v850 = vadd.f32 %v829, %v845
        %v851 = vadd.f32 %v830, %v846
        %v852 = vadd.f32 %v831, %v843
        %v853 = vld [vmem:[#allocation3 + $0x40] sm:$0xff]
        %v854 = vld [vmem:[#allocation3 + $0x48] sm:$0xff]
        %v855 = vld [vmem:[#allocation3 + $0x50] sm:$0xff]
        %859 = vrot.lane.b32.xlu0 %v853, 126
        %v860 = vpop.permute.xlu0 %859
        %861 = vrot.lane.b32.xlu0 %v854, 126
        %v862 = vpop.permute.xlu0 %861
        %863 = vrot.lane.b32.xlu0 %v855, 126
        %v864 = vpop.permute.xlu0 %863
        %vm865 = vcmask 1031168
        %v866 = vsel %vm865, %v860, %v862
        %v867 = vsel %vm865, %v862, %v864
        %v871 = vadd.f32 %v850, %v866
        %v872 = vadd.f32 %v851, %v867
        %v873 = vadd.f32 %v852, %v864
        %v874 = vld [vmem:[#allocation3 + $0x60] sm:$0xff]
        %v875 = vld [vmem:[#allocation3 + $0x68] sm:$0xff]
        %v876 = vld [vmem:[#allocation3 + $0x70] sm:$0xff]
        %880 = vrot.lane.b32.xlu0 %v874, 118
        %v881 = vpop.permute.xlu0 %880
        %882 = vrot.lane.b32.xlu0 %v875, 118
        %v883 = vpop.permute.xlu0 %882
        %884 = vrot.lane.b32.xlu0 %v876, 118
        %v885 = vpop.permute.xlu0 %884
        %vm886 = vcmask 965632
        %v887 = vsel %vm886, %v881, %v883
        %v888 = vsel %vm886, %v883, %v885
        %v892 = vadd.f32 %v871, %v887
        %v893 = vadd.f32 %v872, %v888
        %v894 = vadd.f32 %v873, %v885
        %v895 = vld [vmem:[#allocation3 + $0x80] sm:$0xff]
        %v896 = vld [vmem:[#allocation3 + $0x88] sm:$0xff]
        %v897 = vld [vmem:[#allocation3 + $0x90] sm:$0xff]
        %901 = vrot.lane.b32.xlu0 %v895, 117
        %v902 = vpop.permute.xlu0 %901
        %903 = vrot.lane.b32.xlu0 %v896, 117
        %v904 = vpop.permute.xlu0 %903
        %905 = vrot.lane.b32.xlu0 %v897, 117
        %v906 = vpop.permute.xlu0 %905
        %vm907 = vcmask 957440
        %v908 = vsel %vm907, %v902, %v904
        %v909 = vsel %vm907, %v904, %v906
        %v913 = vadd.f32 %v892, %v908
        %v914 = vadd.f32 %v893, %v909
        %v915 = vadd.f32 %v894, %v906
        %v916 = vld [vmem:[#allocation3 + $0xa0] sm:$0xff]
        %v917 = vld [vmem:[#allocation3 + $0xa8] sm:$0xff]
        %v918 = vld [vmem:[#allocation3 + $0xb0] sm:$0xff]
        %922 = vrot.lane.b32.xlu0 %v916, 116
        %v923 = vpop.permute.xlu0 %922
        %924 = vrot.lane.b32.xlu0 %v917, 116
        %v925 = vpop.permute.xlu0 %924
        %926 = vrot.lane.b32.xlu0 %v918, 116
        %v927 = vpop.permute.xlu0 %926
        %vm928 = vcmask 949248
        %v929 = vsel %vm928, %v923, %v925
        %v930 = vsel %vm928, %v925, %v927
        %v934 = vadd.f32 %v913, %v929
        %v935 = vadd.f32 %v914, %v930
        %v936 = vadd.f32 %v915, %v927
        %v937 = vld [vmem:[#allocation3 + $0xc0] sm:$0xff]
        %v938 = vld [vmem:[#allocation3 + $0xc8] sm:$0xff]
        %v939 = vld [vmem:[#allocation3 + $0xd0] sm:$0xff]
        %943 = vrot.lane.b32.xlu0 %v937, 108
        %v944 = vpop.permute.xlu0 %943
        %945 = vrot.lane.b32.xlu0 %v938, 108
        %v946 = vpop.permute.xlu0 %945
        %947 = vrot.lane.b32.xlu0 %v939, 108
        %v948 = vpop.permute.xlu0 %947
        %vm949 = vcmask 883712
        %v950 = vsel %vm949, %v944, %v946
        %v951 = vsel %vm949, %v946, %v948
        %v955 = vadd.f32 %v934, %v950
        %v956 = vadd.f32 %v935, %v951
        %v957 = vadd.f32 %v936, %v948
        %v958 = vld [vmem:[#allocation3 + $0xe0] sm:$0xff]
        %v959 = vld [vmem:[#allocation3 + $0xe8] sm:$0xff]
        %v960 = vld [vmem:[#allocation3 + $0xf0] sm:$0xff]
        %964 = vrot.lane.b32.xlu0 %v958, 107
        %v965 = vpop.permute.xlu0 %964
        %966 = vrot.lane.b32.xlu0 %v959, 107
        %v967 = vpop.permute.xlu0 %966
        %968 = vrot.lane.b32.xlu0 %v960, 107
        %v969 = vpop.permute.xlu0 %968
        %vm970 = vcmask 875520
        %v971 = vsel %vm970, %v965, %v967
        %v972 = vsel %vm970, %v967, %v969
        %v976 = vadd.f32 %v955, %v971
        %v977 = vadd.f32 %v956, %v972
        %v978 = vadd.f32 %v957, %v969
        %v979 = vld [vmem:[#allocation3 + $0x100] sm:$0xff]
        %v980 = vld [vmem:[#allocation3 + $0x108] sm:$0xff]
        %v981 = vld [vmem:[#allocation3 + $0x110] sm:$0xff]
        %985 = vrot.lane.b32.xlu0 %v979, 106
        %v986 = vpop.permute.xlu0 %985
        %987 = vrot.lane.b32.xlu0 %v980, 106
        %v988 = vpop.permute.xlu0 %987
        %989 = vrot.lane.b32.xlu0 %v981, 106
        %v990 = vpop.permute.xlu0 %989
        %vm991 = vcmask 867328
        %v992 = vsel %vm991, %v986, %v988
        %v993 = vsel %vm991, %v988, %v990
        %v997 = vadd.f32 %v976, %v992
        %v998 = vadd.f32 %v977, %v993
        %v999 = vadd.f32 %v978, %v990
        %v1000 = vld [vmem:[#allocation3 + $0x120] sm:$0xff]
        %v1001 = vld [vmem:[#allocation3 + $0x128] sm:$0xff]
        %v1002 = vld [vmem:[#allocation3 + $0x130] sm:$0xff]
        %1006 = vrot.lane.b32.xlu0 %v1000, 28
        %v1007 = vpop.permute.xlu0 %1006
        %1008 = vrot.lane.b32.xlu0 %v1001, 28
        %v1009 = vpop.permute.xlu0 %1008
        %1010 = vrot.lane.b32.xlu0 %v1002, 28
        %v1011 = vpop.permute.xlu0 %1010
        %vm1012 = vcmask 228352
        %v1013 = vsel %vm1012, %v1007, %v1009
        %v1014 = vsel %vm1012, %v1009, %v1011
        %v1018 = vadd.f32 %v997, %v1013
        %v1019 = vadd.f32 %v998, %v1014
        %v1020 = vadd.f32 %v999, %v1011
        %v1021 = vld [vmem:[#allocation3 + $0x140] sm:$0xff]
        %v1022 = vld [vmem:[#allocation3 + $0x148] sm:$0xff]
        %v1023 = vld [vmem:[#allocation3 + $0x150] sm:$0xff]
        %1027 = vrot.lane.b32.xlu0 %v1021, 27
        %v1028 = vpop.permute.xlu0 %1027
        %1029 = vrot.lane.b32.xlu0 %v1022, 27
        %v1030 = vpop.permute.xlu0 %1029
        %1031 = vrot.lane.b32.xlu0 %v1023, 27
        %v1032 = vpop.permute.xlu0 %1031
        %vm1033 = vcmask 220160
        %v1034 = vsel %vm1033, %v1028, %v1030
        %v1035 = vsel %vm1033, %v1030, %v1032
        %v1039 = vadd.f32 %v1018, %v1034
        %v1040 = vadd.f32 %v1019, %v1035
        %v1041 = vadd.f32 %v1020, %v1032
        %v1042 = vld [vmem:[#allocation3 + $0x160] sm:$0xff]
        %v1043 = vld [vmem:[#allocation3 + $0x168] sm:$0xff]
        %v1044 = vld [vmem:[#allocation3 + $0x170] sm:$0xff]
        %1048 = vrot.lane.b32.xlu0 %v1042, 26
        %v1049 = vpop.permute.xlu0 %1048
        %1050 = vrot.lane.b32.xlu0 %v1043, 26
        %v1051 = vpop.permute.xlu0 %1050
        %1052 = vrot.lane.b32.xlu0 %v1044, 26
        %v1053 = vpop.permute.xlu0 %1052
        %vm1054 = vcmask 211968
        %v1055 = vsel %vm1054, %v1049, %v1051
        %v1056 = vsel %vm1054, %v1051, %v1053
        %v1060 = vadd.f32 %v1039, %v1055
        %v1061 = vadd.f32 %v1040, %v1056
        %v1062 = vadd.f32 %v1041, %v1053
        %v1063 = vld [vmem:[#allocation3 + $0x180] sm:$0xff]
        %v1064 = vld [vmem:[#allocation3 + $0x188] sm:$0xff]
        %v1065 = vld [vmem:[#allocation3 + $0x190] sm:$0xff]
        %1069 = vrot.lane.b32.xlu0 %v1063, 18
        %v1070 = vpop.permute.xlu0 %1069
        %1071 = vrot.lane.b32.xlu0 %v1064, 18
        %v1072 = vpop.permute.xlu0 %1071
        %1073 = vrot.lane.b32.xlu0 %v1065, 18
        %v1074 = vpop.permute.xlu0 %1073
        %vm1075 = vcmask 146432
        %v1076 = vsel %vm1075, %v1070, %v1072
        %v1077 = vsel %vm1075, %v1072, %v1074
        %v1081 = vadd.f32 %v1060, %v1076
        %v1082 = vadd.f32 %v1061, %v1077
        %v1083 = vadd.f32 %v1062, %v1074
        %v1084 = vld [vmem:[#allocation3 + $0x1a0] sm:$0xff]
        %v1085 = vld [vmem:[#allocation3 + $0x1a8] sm:$0xff]
        %v1086 = vld [vmem:[#allocation3 + $0x1b0] sm:$0xff]
        %1090 = vrot.lane.b32.xlu0 %v1084, 17
        %v1091 = vpop.permute.xlu0 %1090
        %1092 = vrot.lane.b32.xlu0 %v1085, 17
        %v1093 = vpop.permute.xlu0 %1092
        %1094 = vrot.lane.b32.xlu0 %v1086, 17
        %v1095 = vpop.permute.xlu0 %1094
        %vm1096 = vcmask 138240
        %v1097 = vsel %vm1096, %v1091, %v1093
        %v1098 = vsel %vm1096, %v1093, %v1095
        %v1102 = vadd.f32 %v1081, %v1097
        %v1103 = vadd.f32 %v1082, %v1098
        %v1104 = vadd.f32 %v1083, %v1095
        %v1105 = vld [vmem:[#allocation3 + $0x1c0] sm:$0xff]
        %v1106 = vld [vmem:[#allocation3 + $0x1c8] sm:$0xff]
        %v1107 = vld [vmem:[#allocation3 + $0x1d0] sm:$0xff]
        %1111 = vrot.lane.b32.xlu0 %v1105, 16
        %v1112 = vpop.permute.xlu0 %1111
        %1113 = vrot.lane.b32.xlu0 %v1106, 16
        %v1114 = vpop.permute.xlu0 %1113
        %1115 = vrot.lane.b32.xlu0 %v1107, 16
        %v1116 = vpop.permute.xlu0 %1115
        %vm1117 = vcmask 130048
        %v1118 = vsel %vm1117, %v1112, %v1114
        %v1119 = vsel %vm1117, %v1114, %v1116
        %v1123 = vadd.f32 %v1102, %v1118
        %v1124 = vadd.f32 %v1103, %v1119
        %v1125 = vadd.f32 %v1104, %v1116
        %v1126 = vld [vmem:[#allocation3 + $0x1e0] sm:$0xff]
        %v1127 = vld [vmem:[#allocation3 + $0x1e8] sm:$0xff]
        %v1128 = vld [vmem:[#allocation3 + $0x1f0] sm:$0xff]
        %1132 = vrot.lane.b32.xlu0 %v1126, 8
        %v1133 = vpop.permute.xlu0 %1132
        %1134 = vrot.lane.b32.xlu0 %v1127, 8
        %v1135 = vpop.permute.xlu0 %1134
        %1136 = vrot.lane.b32.xlu0 %v1128, 8
        %v1137 = vpop.permute.xlu0 %1136
        %vm1138 = vcmask 64512
        %v1139 = vsel %vm1138, %v1133, %v1135
        %v1140 = vsel %vm1138, %v1135, %v1137
        %v1144 = vadd.f32 %v1123, %v1139
        %v1145 = vadd.f32 %v1124, %v1140
        %v1146 = vadd.f32 %v1125, %v1137
        %v1147 = vld [vmem:[#allocation3 + $0x200] sm:$0xff]
        %v1148 = vld [vmem:[#allocation3 + $0x208] sm:$0xff]
        %v1149 = vld [vmem:[#allocation3 + $0x210] sm:$0xff]
        %1153 = vrot.lane.b32.xlu0 %v1147, 7
        %v1154 = vpop.permute.xlu0 %1153
        %1155 = vrot.lane.b32.xlu0 %v1148, 7
        %v1156 = vpop.permute.xlu0 %1155
        %1157 = vrot.lane.b32.xlu0 %v1149, 7
        %v1158 = vpop.permute.xlu0 %1157
        %vm1159 = vcmask 56320
        %v1160 = vsel %vm1159, %v1154, %v1156
        %v1161 = vsel %vm1159, %v1156, %v1158
        %v1165 = vadd.f32 %v1144, %v1160
        %v1166 = vadd.f32 %v1145, %v1161
        %v1167 = vadd.f32 %v1146, %v1158
        %v1168 = vld [vmem:[#allocation3 + $0x220] sm:$0xff]
        %v1169 = vld [vmem:[#allocation3 + $0x228] sm:$0xff]
        %v1170 = vld [vmem:[#allocation3 + $0x230] sm:$0xff]
        %1174 = vrot.lane.b32.xlu0 %v1168, 6
        %v1175 = vpop.permute.xlu0 %1174
        %1176 = vrot.lane.b32.xlu0 %v1169, 6
        %v1177 = vpop.permute.xlu0 %1176
        %1178 = vrot.lane.b32.xlu0 %v1170, 6
        %v1179 = vpop.permute.xlu0 %1178
        %vm1180 = vcmask 48128
        %v1181 = vsel %vm1180, %v1175, %v1177
        %v1182 = vsel %vm1180, %v1177, %v1179
        %v1186 = vadd.f32 %v1165, %v1181
        %v1187 = vadd.f32 %v1166, %v1182
        %v1188 = vadd.f32 %v1167, %v1179
        %v1189 = vld [vmem:[#allocation3 + $0x248] sm:$0xff]
        %v1190 = vld [vmem:[#allocation3 + $0x250] sm:$0xff]
        %v1191 = vld [vmem:[#allocation3 + $0x258] sm:$0xff]
        %1195 = vrot.lane.b32.xlu0 %v1189, 56
        %v1196 = vpop.permute.xlu0 %1195
        %1197 = vrot.lane.b32.xlu0 %v1190, 56
        %v1198 = vpop.permute.xlu0 %1197
        %1199 = vrot.lane.b32.xlu0 %v1191, 56
        %v1200 = vpop.permute.xlu0 %1199
        %vm1201 = vcmask 457728
        %v1202 = vsel %vm1201, %v1196, %v1198
        %v1203 = vsel %vm1201, %v1198, %v1200
        %v1207 = vadd.f32 %v1186, %v1202
        %v1208 = vadd.f32 %v1187, %v1203
        %v1209 = vadd.f32 %v1188, %v1200
        %v1210 = vld [vmem:[#allocation3 + $0x268] sm:$0xff]
        %v1211 = vld [vmem:[#allocation3 + $0x270] sm:$0xff]
        %v1212 = vld [vmem:[#allocation3 + $0x278] sm:$0xff]
        %1216 = vrot.lane.b32.xlu0 %v1210, 55
        %v1217 = vpop.permute.xlu0 %1216
        %1218 = vrot.lane.b32.xlu0 %v1211, 55
        %v1219 = vpop.permute.xlu0 %1218
        %1220 = vrot.lane.b32.xlu0 %v1212, 55
        %v1221 = vpop.permute.xlu0 %1220
        %vm1222 = vcmask 449536
        %v1223 = vsel %vm1222, %v1217, %v1219
        %v1224 = vsel %vm1222, %v1219, %v1221
        %v1228 = vadd.f32 %v1207, %v1223
        %v1229 = vadd.f32 %v1208, %v1224
        %v1230 = vadd.f32 %v1209, %v1221
        %v1231 = vld [vmem:[#allocation3 + $0x288] sm:$0xff]
        %v1232 = vld [vmem:[#allocation3 + $0x290] sm:$0xff]
        %v1233 = vld [vmem:[#allocation3 + $0x298] sm:$0xff]
        %1237 = vrot.lane.b32.xlu0 %v1231, 54
        %v1238 = vpop.permute.xlu0 %1237
        %1239 = vrot.lane.b32.xlu0 %v1232, 54
        %v1240 = vpop.permute.xlu0 %1239
        %1241 = vrot.lane.b32.xlu0 %v1233, 54
        %v1242 = vpop.permute.xlu0 %1241
        %vm1243 = vcmask 441344
        %v1244 = vsel %vm1243, %v1238, %v1240
        %v1245 = vsel %vm1243, %v1240, %v1242
        %v1249 = vadd.f32 %v1228, %v1244
        %v1250 = vadd.f32 %v1229, %v1245
        %v1251 = vadd.f32 %v1230, %v1242
        %v1252 = vld [vmem:[#allocation3 + $0x2a8] sm:$0xff]
        %v1253 = vld [vmem:[#allocation3 + $0x2b0] sm:$0xff]
        %v1254 = vld [vmem:[#allocation3 + $0x2b8] sm:$0xff]
        %1258 = vrot.lane.b32.xlu0 %v1252, 46
        %v1259 = vpop.permute.xlu0 %1258
        %1260 = vrot.lane.b32.xlu0 %v1253, 46
        %v1261 = vpop.permute.xlu0 %1260
        %1262 = vrot.lane.b32.xlu0 %v1254, 46
        %v1263 = vpop.permute.xlu0 %1262
        %vm1264 = vcmask 375808
        %v1265 = vsel %vm1264, %v1259, %v1261
        %v1266 = vsel %vm1264, %v1261, %v1263
        %v1270 = vadd.f32 %v1249, %v1265
        %v1271 = vadd.f32 %v1250, %v1266
        %v1272 = vadd.f32 %v1251, %v1263
        %v1273 = vld [vmem:[#allocation3 + $0x2c8] sm:$0xff]
        %v1274 = vld [vmem:[#allocation3 + $0x2d0] sm:$0xff]
        %v1275 = vld [vmem:[#allocation3 + $0x2d8] sm:$0xff]
        %1279 = vrot.lane.b32.xlu0 %v1273, 45
        %v1280 = vpop.permute.xlu0 %1279
        %1281 = vrot.lane.b32.xlu0 %v1274, 45
        %v1282 = vpop.permute.xlu0 %1281
        %1283 = vrot.lane.b32.xlu0 %v1275, 45
        %v1284 = vpop.permute.xlu0 %1283
        %vm1285 = vcmask 367616
        %v1286 = vsel %vm1285, %v1280, %v1282
        %v1287 = vsel %vm1285, %v1282, %v1284
        %v1291 = vadd.f32 %v1270, %v1286
        %v1292 = vadd.f32 %v1271, %v1287
        %v1293 = vadd.f32 %v1272, %v1284
        %v1294 = vld [vmem:[#allocation3 + $0x2e8] sm:$0xff]
        %v1295 = vld [vmem:[#allocation3 + $0x2f0] sm:$0xff]
        %v1296 = vld [vmem:[#allocation3 + $0x2f8] sm:$0xff]
        %1300 = vrot.lane.b32.xlu0 %v1294, 44
        %v1301 = vpop.permute.xlu0 %1300
        %1302 = vrot.lane.b32.xlu0 %v1295, 44
        %v1303 = vpop.permute.xlu0 %1302
        %1304 = vrot.lane.b32.xlu0 %v1296, 44
        %v1305 = vpop.permute.xlu0 %1304
        %vm1306 = vcmask 359424
        %v1307 = vsel %vm1306, %v1301, %v1303
        %v1308 = vsel %vm1306, %v1303, %v1305
        %v1312 = vadd.f32 %v1291, %v1307
        %v1313 = vadd.f32 %v1292, %v1308
        %v1314 = vadd.f32 %v1293, %v1305
        %v1315 = vld [vmem:[#allocation3 + $0x308] sm:$0xff]
        %v1316 = vld [vmem:[#allocation3 + $0x310] sm:$0xff]
        %v1317 = vld [vmem:[#allocation3 + $0x318] sm:$0xff]
        %1321 = vrot.lane.b32.xlu0 %v1315, 36
        %v1322 = vpop.permute.xlu0 %1321
        %1323 = vrot.lane.b32.xlu0 %v1316, 36
        %v1324 = vpop.permute.xlu0 %1323
        %1325 = vrot.lane.b32.xlu0 %v1317, 36
        %v1326 = vpop.permute.xlu0 %1325
        %vm1327 = vcmask 293888
        %v1328 = vsel %vm1327, %v1322, %v1324
        %v1329 = vsel %vm1327, %v1324, %v1326
        %v1333 = vadd.f32 %v1312, %v1328
        %v1334 = vadd.f32 %v1313, %v1329
        %v1335 = vadd.f32 %v1314, %v1326
        %v1336 = vld [vmem:[#allocation3 + $0x328] sm:$0xff]
        %v1337 = vld [vmem:[#allocation3 + $0x330] sm:$0xff]
        %v1338 = vld [vmem:[#allocation3 + $0x338] sm:$0xff]
        %1342 = vrot.lane.b32.xlu0 %v1336, 35
        %v1343 = vpop.permute.xlu0 %1342
        %1344 = vrot.lane.b32.xlu0 %v1337, 35
        %v1345 = vpop.permute.xlu0 %1344
        %1346 = vrot.lane.b32.xlu0 %v1338, 35
        %v1347 = vpop.permute.xlu0 %1346
        %vm1348 = vcmask 285696
        %v1349 = vsel %vm1348, %v1343, %v1345
        %v1350 = vsel %vm1348, %v1345, %v1347
        %v1354 = vadd.f32 %v1333, %v1349
        %v1355 = vadd.f32 %v1334, %v1350
        %v1356 = vadd.f32 %v1335, %v1347
        %v1357 = vld [vmem:[#allocation3 + $0x348] sm:$0xff]
        %v1358 = vld [vmem:[#allocation3 + $0x350] sm:$0xff]
        %v1359 = vld [vmem:[#allocation3 + $0x358] sm:$0xff]
        %1363 = vrot.lane.b32.xlu0 %v1357, 34
        %v1364 = vpop.permute.xlu0 %1363
        %1365 = vrot.lane.b32.xlu0 %v1358, 34
        %v1366 = vpop.permute.xlu0 %1365
        %1367 = vrot.lane.b32.xlu0 %v1359, 34
        %v1368 = vpop.permute.xlu0 %1367
        %vm1369 = vcmask 277504
        %v1370 = vsel %vm1369, %v1364, %v1366
        %v1371 = vsel %vm1369, %v1366, %v1368
        %v1375 = vadd.f32 %v1354, %v1370
        %v1376 = vadd.f32 %v1355, %v1371
        %v1377 = vadd.f32 %v1356, %v1368
        %v1378 = vld [vmem:[%s2] sm:$0xff]
        %1380 = vset.pattern.permute.xlu0 0
        %1381 = vperm.xlu0 %1380, %v1378
        %v1382 = vpop.permute.xlu0 %1381
        %v1384 = vadd.f32 %v1375, %v1382
        %v1385 = vadd.f32 %v1376, %v1382
        %v1386 = vadd.f32 %v1377, %v1382
        %v1387 = vxor.u32 %v1384, 2147483648
        %v1388 = vxor.u32 %v1385, 2147483648
        %v1389 = vxor.u32 %v1386, 2147483648
        %v1390 = vmul.f32 %v1387, 1.442695
        %v1391 = vpow.pop %v1390
        %v1392 = vmul.f32 %v1388, 1.442695
        %v1393 = vpow.pop %v1392
        %v1394 = vmul.f32 %v1389, 1.442695
        %v1395 = vpow.pop %v1394
        %v1396 = vadd.f32 %v1391, 1.0
        %v1397 = vadd.f32 %v1393, 1.0
        %v1398 = vadd.f32 %v1395, 1.0
        %v1399 = vrcp.pop %v1396
        %v1400 = vmul.f32 %v1396, %v1399
        %v1401 = vsub.f32 1.0, %v1400
        %v1402 = vmul.f32 %v1399, %v1401
        %v1403 = vadd.f32 %v1399, %v1402
        %vm1404 = vweird.f32 %v1396
        %vm1405 = vweird.f32 %v1399
        %vm1406 = vmor %vm1404, %vm1405
        %v1407 = vsel %vm1406, %v1399, %v1403
        %v1408 = vand.u32 2147483647, %v1396
        %vm1409 = vcmp.eq.f32.partialorder %v1408, 8.507059e+37
        %v1410 = vand.u32 %v1396, 2147483648
        %v1411 = vor.u32 1.1754944e-38, %v1410
        %v1412 = vsel %vm1409, %v1411, %v1407
        %v1413 = vmul.f32 1.0, %v1412
        %v1414 = vrcp.pop %v1397
        %v1415 = vmul.f32 %v1397, %v1414
        %v1416 = vsub.f32 1.0, %v1415
        %v1417 = vmul.f32 %v1414, %v1416
        %v1418 = vadd.f32 %v1414, %v1417
        %vm1419 = vweird.f32 %v1397
        %vm1420 = vweird.f32 %v1414
        %vm1421 = vmor %vm1419, %vm1420
        %v1422 = vsel %vm1421, %v1414, %v1418
        %v1423 = vand.u32 2147483647, %v1397
        %vm1424 = vcmp.eq.f32.partialorder %v1423, 8.507059e+37
        %v1425 = vand.u32 %v1397, 2147483648
        %v1426 = vor.u32 1.1754944e-38, %v1425
        %v1427 = vsel %vm1424, %v1426, %v1422
        %v1428 = vmul.f32 1.0, %v1427
        %v1429 = vrcp.pop %v1398
        %v1430 = vmul.f32 %v1398, %v1429
        %v1431 = vsub.f32 1.0, %v1430
        %v1432 = vmul.f32 %v1429, %v1431
        %v1433 = vadd.f32 %v1429, %v1432
        %vm1434 = vweird.f32 %v1398
        %vm1435 = vweird.f32 %v1429
        %vm1436 = vmor %vm1434, %vm1435
        %v1437 = vsel %vm1436, %v1429, %v1433
        %v1438 = vand.u32 2147483647, %v1398
        %vm1439 = vcmp.eq.f32.partialorder %v1438, 8.507059e+37
        %v1440 = vand.u32 %v1398, 2147483648
        %v1441 = vor.u32 1.1754944e-38, %v1440
        %v1442 = vsel %vm1439, %v1441, %v1437
        %v1443 = vmul.f32 1.0, %v1442
        %v1444 = vmul.f32 %v1413, 0.00390625
        %v1445 = vmul.f32 %v1428, 0.00390625
        %v1446 = vmul.f32 %v1443, 0.00390625
        %v1447 = vpack.c.bf16 %v1444, %v1444
        %v1448 = vpack.c.bf16 %v1445, %v1445
        %v1449 = vpack.c.bf16 %v1446, %v1446
        %v1450 = vld [vmem:[%s134] sm:$0xf]
        %1451 = vst [vmem:[#allocation1] ss:$4 sm:$0xff] %v252
        %v1452 = vld.sshfl [vmem:[#allocation1] sm:$0xff pattern:$0x73625140]
        %v1454 = vld.sshfl [vmem:[#allocation1 + $0x8] sm:$0xff pattern:$0x73625140]
        %v1456 = vld.sshfl [vmem:[#allocation1 + $0x10] sm:$0xff pattern:$0x73625140]
        %1458 = vrot.lane.b32.xlu0 %v1452, 16
        %v1459 = vpop.permute.xlu0 %1458
        %1460 = vrot.lane.b32.xlu0 %v1454, 16
        %v1461 = vpop.permute.xlu0 %1460
        %1462 = vrot.lane.b32.xlu0 %v1456, 16
        %v1463 = vpop.permute.xlu0 %1462
        %vm1464 = vcmask 130048
        %v1465 = vsel %vm1464, %v1459, %v1461
        %v1466 = vsel %vm1464, %v1461, %v1463
        %1472 = vrot.lane.b32.xlu0 %v1447, 127
        %v1473 = vpop.permute.xlu0 %1472
        %1474 = vrot.lane.b32.xlu0 %v1448, 127
        %v1475 = vpop.permute.xlu0 %1474
        %1476 = vrot.lane.b32.xlu0 %v1449, 127
        %v1477 = vpop.permute.xlu0 %1476
        %vm1478 = vcmask 1039360
        %v1479 = vsel %vm1478, %v1473, %v1475
        %v1480 = vsel %vm1478, %v1475, %v1477
        %1483 = vmatpush.bf16.xpose.msra.mxu0 0
        %1484 = vmatpush.bf16.xpose.msra.mxu0 0
        %1485 = vmatpush.bf16.xpose.msra.mxu0 0
        %1486 = vmatpush.bf16.xpose.msra.mxu0 0
        %1487 = vmatpush.bf16.xpose.msra.mxu0 0
        %1488 = vmatpush.bf16.xpose.msra.mxu0 0
        %1489 = vmatpush.bf16.xpose.msra.mxu0 0
        %1490 = vmatpush.bf16.xpose.msra.mxu0 %v1479
        %1491 = vmatmul.bf16.gmra.mxu0 %v1465
        %v1492 = vpop.f32.mrf.mxu0
        %v1493 = vadd.f32 0.0, %v1492
        %v1494 = vpop.f32.mrf.mxu0
        %1495 = vdwg.mxu0
        %1496 = vmatpush.bf16.xpose.msra.mxu0 0
        %1497 = vmatpush.bf16.xpose.msra.mxu0 0
        %1498 = vmatpush.bf16.xpose.msra.mxu0 0
        %1499 = vmatpush.bf16.xpose.msra.mxu0 0
        %1500 = vmatpush.bf16.xpose.msra.mxu0 0
        %1501 = vmatpush.bf16.xpose.msra.mxu0 0
        %1502 = vmatpush.bf16.xpose.msra.mxu0 0
        %1503 = vmatpush.bf16.xpose.msra.mxu0 %v1480
        %1504 = vmatmul.bf16.gmra.mxu0 %v1466
        %v1505 = vpop.f32.mrf.mxu0
        %v1506 = vadd.f32 %v1493, %v1505
        %v1507 = vpop.f32.mrf.mxu0
        %1508 = vdwg.mxu0
        %v1509 = vadd.f32 %v1450, %v1506
        %vm1510 = vcmask 60416
        %1511 = vst.msk [vmem:[%s134] sm:$0xf] %vm1510, %v1509
        %s1512 = sand.u32 %s79, 1
        %s1513 = scalar_lea.sflag [#allocation6], %s1512
        %s1514 = sand.u32 %s79, 1
        %s1515 = smul.addr %s1514, 4
        %s1516 = scalar_lea.vmem [#allocation5], %s1515
        // Predicated region
        $region109: #{tpu_custom_call.1} parent=27 // pred_check
          %p1517 = pneg %p89
        $region110: #{tpu_custom_call.1} parent=27 // pred_check_branch
          %1519 = sbr.rel (%p1517) target = $region112
        $region111: #{tpu_custom_call.1} parent=27 // pred_region
          %1521 = vsyncadd %s1513, 0
          %s1522 = smul.addr %s21, 4
          %s1523 = scalar_lea.hbm %s3, %s1522
          %s1525 = sshll.u32 %s1516, 4
          %s1526 = int_to_ptr.vmem [resolvable:$true] %s1525
          %s1527 = sshll.u32 %s1523, 4
          %s1528 = int_to_ptr.hbm [resolvable:$true] %s1527
          %1530 = dma.vmem_to_hbm [thread:$0]  %s1526, 64, %s1528, %s1513
        $region112: #{tpu_custom_call.1} parent=27 // pred_fallthru
          _
      $region28: #{tpu_custom_call.1} parent=5 // pred_fallthru
        _
      %p1531 = scmp.le.s32.totalorder 2, %s12
      // Predicated region
      $region113: #{tpu_custom_call.1} parent=5 // pred_check
        %p1532 = pneg %p1531
      $region114: #{tpu_custom_call.1} parent=5 // pred_check_branch
        %1534 = sbr.rel (%p1532) target = $region116
      $region115: #{tpu_custom_call.1} parent=5 // pred_region
        %s1535 = ssub.s32 %s12, 2
        // Predicated region
        $region117: #{tpu_custom_call.1} parent=115 // pred_check
          %p1536 = pneg %p95
        $region118: #{tpu_custom_call.1} parent=115 // pred_check_branch
          %1538 = sbr.rel (%p1536) target = $region120
        $region119: #{tpu_custom_call.1} parent=115 // pred_region
          %s1539 = sand.u32 %s80, 1
          %s1540 = scalar_lea.sflag [#allocation6], %s1539
          %s1541 = sand.u32 %s80, 1
          %s1542 = smul.addr %s1541, 4
          %s1543 = scalar_lea.vmem [#allocation5], %s1542
          %1545 = dma.done %s1540, 64
        $region120: #{tpu_custom_call.1} parent=115 // pred_fallthru
          _
      $region116: #{tpu_custom_call.1} parent=5 // pred_fallthru
        _
    $region6: #{tpu_custom_call.1} parent=1 // loop_footer
      %s16 = sadd.s32 1, %s12
    $region7: #{tpu_custom_call.1} parent=1 // loop_footer_branch
      %11 = sbr.rel target = $region3
    $region8: #{tpu_custom_call.1} parent=1 // loop_exit
      _
    %1546 = vsyncpa [#allocation6], 1
    %s1547 = scalar_lea.sflag [#allocation6], 1
    %1548 = vsyncpa %s1547, 1
  %1549 = vsyncmov [#allocation4]
  %s1550 = vpop.sfrf %1549
  %p1551 = scmp.eq.s32.totalorder %s1550, 0
  %p1552 = pneg %p1551
  %1554 = shalt.err (%p1552)
  %s1555 = scalar_lea.sflag [#allocation4], 1
  %1556 = vsyncmov %s1555
  %s1557 = vpop.sfrf %1556
  %p1558 = scmp.eq.s32.totalorder %s1557, 0
  %p1559 = pneg %p1558
  %1561 = shalt.err (%p1559)

</llo_original>
